<compile_context>
chip_gen: v5e
topology: v5e:2x2
jax: 0.10.0
libtpu: 0.0.40
codegen_flags: <defaults>
</compile_context>

<pallas_src>
import functools

import numpy as np
import jax
import jax.numpy as jnp
from jax.experimental import pallas as pl
from jax.experimental.pallas import tpu as pltpu

EPS = 1e-5  # torch.nn.LayerNorm default


def _layernorm(x, g, b):
    # x: (M, D); g, b: (1, D)  -- biased variance, like torch.nn.LayerNorm
    mu = jnp.mean(x, axis=-1, keepdims=True)
    var = jnp.mean((x - mu) ** 2, axis=-1, keepdims=True)
    return (x - mu) * jax.lax.rsqrt(var + EPS) * g + b


# ----------------------------------------------------------------------------
# Fused transformer: grid = (batch_blocks, layers).  The activation for one
# batch block stays resident in a VMEM scratch across the layer axis.
# ----------------------------------------------------------------------------
def _transformer_kernel(n_heads,
                        x_ref,
                        l1g_ref, l1b_ref, wqkv_ref, bqkv_ref, wo_ref, bo_ref,
                        l2g_ref, l2b_ref, wfc_ref, bfc_ref, wp_ref, bp_ref,
                        out_ref, acc_ref, attn_ref):
    layer = pl.program_id(1)
    B, L, D = x_ref.shape
    BL = B * L
    hd = D // n_heads
    scale = 1.0 / np.sqrt(hd)

    # Load the fresh batch block into the resident activation on layer 0.
    @pl.when(layer == 0)
    def _():
        acc_ref[...] = x_ref[...].reshape(BL, D)

    x = acc_ref[...]                                        # (B*L, D) f32

    # ---- LN1 + causal multi-head self-attention (bf16 matmuls, f32 accum) ----
    h = _layernorm(x, l1g_ref[0], l1b_ref[0])
    qkv = jnp.dot(h.astype(jnp.bfloat16), wqkv_ref[0],
                  preferred_element_type=jnp.float32) + bqkv_ref[0]   # (B*L, 3D)

    # Causal additive mask generated in-kernel (no (L, L) DMA / buffer).
    row = jax.lax.broadcasted_iota(jnp.int32, (L, L), 0)
    col = jax.lax.broadcasted_iota(jnp.int32, (L, L), 1)
    mask = jnp.where(col > row, jnp.float32(-1e9), jnp.float32(0.0))  # (L, L)

    # Static head loop, batched over the batch block; per-head outputs are
    # written straight into a VMEM scratch at static lane offsets (no concat).
    # TODO(synk): for real CLIP shapes (L=77) pad L to 128 and mask padded keys
    # so the score/softmax/PV path is fully lane-dense.
    for hi in range(n_heads):
        q_h = (qkv[:, hi * hd:(hi + 1) * hd] * scale) \
            .reshape(B, L, hd).astype(jnp.bfloat16)
        k_h = qkv[:, D + hi * hd:D + (hi + 1) * hd] \
            .reshape(B, L, hd).astype(jnp.bfloat16)
        v_h = qkv[:, 2 * D + hi * hd:2 * D + (hi + 1) * hd] \
            .reshape(B, L, hd).astype(jnp.bfloat16)
        # QK^T: contract the feature axis of both operands (no explicit .T).
        s = jnp.einsum('bqd,bkd->bqk', q_h, k_h,
                       preferred_element_type=jnp.float32) + mask
        s = s - jnp.max(s, axis=-1, keepdims=True)
        p = jnp.exp(s)
        p = p * pl.reciprocal(jnp.sum(p, axis=-1, keepdims=True), approx=True)
        o_h = jnp.einsum('bqk,bkd->bqd', p.astype(jnp.bfloat16), v_h,
                         preferred_element_type=jnp.float32)
        attn_ref[:, hi * hd:(hi + 1) * hd] = o_h.reshape(BL, hd)

    attn = jnp.dot(attn_ref[...].astype(jnp.bfloat16), wo_ref[0],
                   preferred_element_type=jnp.float32) + bo_ref[0]
    x = x + attn

    # ---- LN2 + MLP with QuickGELU (x * sigmoid(1.702 x)) ----
    h = _layernorm(x, l2g_ref[0], l2b_ref[0])
    h = jnp.dot(h.astype(jnp.bfloat16), wfc_ref[0],
                preferred_element_type=jnp.float32) + bfc_ref[0]
    h = h * jax.nn.sigmoid(1.702 * h)
    h = jnp.dot(h.astype(jnp.bfloat16), wp_ref[0],
                preferred_element_type=jnp.float32) + bp_ref[0]
    x = x + h

    acc_ref[...] = x

    @pl.when(layer == pl.num_programs(1) - 1)
    def _():
        out_ref[...] = x.reshape(B, L, D)


def transformer_forward(x, stacked, n_heads, batch_block=None):
    """x: (N, L, D) f32; stacked: 12 arrays with a leading LAYERS axis."""
    N, L, D = x.shape
    n_layers = stacked[0].shape[0]
    if batch_block is None:
        batch_block = min(N, 4)        # M >= a few sequences helps MXU fill
    assert N % batch_block == 0
    BL = batch_block * L

    in_specs = [pl.BlockSpec((batch_block, L, D), lambda b, l: (b, 0, 0))]
    for p in stacked:
        in_specs.append(
            pl.BlockSpec((1, p.shape[1], p.shape[2]), lambda b, l: (l, 0, 0)))

    return pl.pallas_call(
        functools.partial(_transformer_kernel, n_heads),
        out_shape=jax.ShapeDtypeStruct((N, L, D), jnp.float32),
        grid_spec=pltpu.PrefetchScalarGridSpec(
            num_scalar_prefetch=0,
            grid=(N // batch_block, n_layers),
            in_specs=in_specs,
            out_specs=pl.BlockSpec((batch_block, L, D), lambda b, l: (b, 0, 0)),
            scratch_shapes=[pltpu.VMEM((BL, D), jnp.float32),   # resident activation
                            pltpu.VMEM((BL, D), jnp.float32)],  # per-head attn output
        ),
        compiler_params=pltpu.CompilerParams(
            dimension_semantics=("parallel", "arbitrary")),
    )(x, *stacked)


# ----------------------------------------------------------------------------
# Final: ln_final on the gathered EOT rows + @ text_projection
# (LayerNorm is per-token, so gathering before LN == PyTorch's LN-then-gather.)
# ----------------------------------------------------------------------------
def _final_kernel(x_ref, g_ref, b_ref, proj_ref, out_ref):
    x = _layernorm(x_ref[...], g_ref[...], b_ref[...])
    out_ref[...] = jnp.dot(x.astype(jnp.bfloat16), proj_ref[...],
                           preferred_element_type=jnp.float32)


def final_project(x_eot, gamma, beta, proj_bf16):
    # N (prompts x classes) is tiny here; for large prompt ensembles tile N.
    N, D = x_eot.shape
    E = proj_bf16.shape[1]
    return pl.pallas_call(
        _final_kernel,
        out_shape=jax.ShapeDtypeStruct((N, E), jnp.float32),
        grid_spec=pltpu.PrefetchScalarGridSpec(
            num_scalar_prefetch=0,
            grid=(1,),
            in_specs=[pl.BlockSpec((N, D), lambda i: (0, 0)),
                      pl.BlockSpec((1, D), lambda i: (0, 0)),
                      pl.BlockSpec((1, D), lambda i: (0, 0)),
                      pl.BlockSpec((D, E), lambda i: (0, 0))],
            out_specs=pl.BlockSpec((N, E), lambda i: (0, 0)),
        ),
    )(x_eot, gamma, beta, proj_bf16)


# ----------------------------------------------------------------------------
# Parameter preparation: stack per-layer params along a leading layer axis and
# store the big matmul weights in bf16 (halves HBM traffic and VMEM footprint).
# ----------------------------------------------------------------------------
_WEIGHT_IDX = (2, 4, 8, 10)   # wqkv, wo, wfc, wproj


def prepare_params(raw):
    blocks = raw["blocks"]
    stacked = []
    for i in range(12):
        s = jnp.stack([blk[i] for blk in blocks], axis=0)
        if i in _WEIGHT_IDX:
            s = s.astype(jnp.bfloat16)
        else:
            s = s.astype(jnp.float32)
        stacked.append(s)
    return {
        "pos_emb": raw["pos_emb"].astype(jnp.float32),
        "blocks_stacked": stacked,
        "ln_f_g": raw["ln_f_g"].astype(jnp.float32),
        "ln_f_b": raw["ln_f_b"].astype(jnp.float32),
        "proj": raw["proj"].astype(jnp.bfloat16),
    }


# ----------------------------------------------------------------------------
# TextEncoder.forward
# ----------------------------------------------------------------------------
def text_encoder_forward(prompts, tokenized_prompts, prepared, n_heads,
                         batch_block=None):
    # glue: positional-embedding add (elementwise).  The PyTorch permutes to
    # seq-first and back are only for nn.MultiheadAttention and are no-ops here.
    x = prompts.astype(jnp.float32) + prepared["pos_emb"][None]
    x = transformer_forward(x, prepared["blocks_stacked"], n_heads, batch_block)
    # glue: EOT index + row gather (data-dependent index)
    eot = jnp.argmax(tokenized_prompts, axis=-1)
    x_eot = x[jnp.arange(x.shape[0]), eot]
    return final_project(x_eot, prepared["ln_f_g"], prepared["ln_f_b"],
                         prepared["proj"])


# ----------------------------------------------------------------------------
# pure-JAX (f32) reference for the correctness check
# ----------------------------------------------------------------------------
def _ref_block(x, p, mask, n_heads):
    (l1g, l1b, wqkv, bqkv, wo, bo, l2g, l2b, wfc, bfc, wp, bpj) = p
    L, D = x.shape
    hd = D // n_heads
    h = _layernorm(x, l1g, l1b)
    qkv = h @ wqkv + bqkv
    q, k, v = qkv[:, :D], qkv[:, D:2 * D], qkv[:, 2 * D:]
    outs = []
    for i in range(n_heads):
        sl = slice(i * hd, (i + 1) * hd)
        s = (q[:, sl] / np.sqrt(hd)) @ k[:, sl].T + mask
        outs.append(jax.nn.softmax(s, axis=-1) @ v[:, sl])
    x = x + (jnp.concatenate(outs, -1) @ wo + bo)
    h = _layernorm(x, l2g, l2b)
    h = h @ wfc + bfc
    h = h * jax.nn.sigmoid(1.702 * h)
    return x + (h @ wp + bpj)


def reference_forward(prompts, tok, params, n_heads):
    x = prompts + params["pos_emb"][None]
    L = x.shape[1]
    mask = jnp.triu(jnp.full((L, L), -1e9, dtype=jnp.float32), k=1)
    for p in params["blocks"]:
        x = jax.vmap(lambda xi: _ref_block(xi, p, mask, n_heads))(x)
    eot = jnp.argmax(tok, axis=-1)
    xe = x[jnp.arange(x.shape[0]), eot]
    xe = _layernorm(xe, params["ln_f_g"], params["ln_f_b"])
    return xe @ params["proj"]


# ----------------------------------------------------------------------------
if __name__ == "__main__":
    N, L, D, H, LAYERS, E = 2, 8, 32, 4, 2, 16   # batch, ctx_len, width, heads, layers, embed_dim

    key = jax.random.PRNGKey(0)

    def nrm(k, shape, std=0.05):
        return (std * jax.random.normal(k, shape)).astype(jnp.float32)

    keys = iter(jax.random.split(key, 64))
    blocks = []
    for _ in range(LAYERS):
        blocks.append((
            1.0 + nrm(next(keys), (1, D), 0.02),   # ln1 gamma
            nrm(next(keys), (1, D), 0.02),         # ln1 beta
            nrm(next(keys), (D, 3 * D)),           # in_proj weight (Wqkv)
            nrm(next(keys), (1, 3 * D), 0.02),     # in_proj bias
            nrm(next(keys), (D, D)),               # out_proj weight
            nrm(next(keys), (1, D), 0.02),         # out_proj bias
            1.0 + nrm(next(keys), (1, D), 0.02),   # ln2 gamma
            nrm(next(keys), (1, D), 0.02),         # ln2 beta
            nrm(next(keys), (D, 4 * D)),           # mlp c_fc weight
            nrm(next(keys), (1, 4 * D), 0.02),     # mlp c_fc bias
            nrm(next(keys), (4 * D, D)),           # mlp c_proj weight
            nrm(next(keys), (1, D), 0.02),         # mlp c_proj bias
        ))

    params = {
        "pos_emb": nrm(next(keys), (L, D), 0.1),
        "blocks": blocks,
        "ln_f_g": 1.0 + nrm(next(keys), (1, D), 0.02),
        "ln_f_b": nrm(next(keys), (1, D), 0.02),
        "proj": nrm(next(keys), (D, E), 1.0 / np.sqrt(D)),
    }

    prompts = nrm(next(keys), (N, L, D), 0.2)                 # token embeddings
    tok = np.zeros((N, L), dtype=np.int32)
    tok[0, :6] = [49406, 10, 20, 30, 40, 49407]               # EOT at position 5
    tok[1, :8] = [49406, 1, 2, 3, 4, 5, 6, 49407]             # EOT at position 7
    tokenized_prompts = jnp.asarray(tok)

    prepared = prepare_params(params)
    out = text_encoder_forward(prompts, tokenized_prompts, prepared, H)
    out = jax.block_until_ready(out)

    ref = jax.block_until_ready(reference_forward(prompts, tokenized_prompts, params, H))
    assert out.shape == (N, E)
    # bf16 matmul operands (f32 accumulation) -> slightly looser tolerance vs f32 ref
    assert np.allclose(np.asarray(out), np.asarray(ref), atol=3e-2, rtol=3e-2), \
        "Pallas output mismatch vs reference"

    print("KERNEL_OK")
</pallas_src>

<mosaic_0001>
module attributes {stable_mosaic.version = 11 : i64} {
  func.func @_transformer_kernel(%arg0: i32, %arg1: i32, %arg2: memref<2x8x32xf32, #tpu.memory_space<vmem>>, %arg3: memref<1x1x32xf32, #tpu.memory_space<vmem>>, %arg4: memref<1x1x32xf32, #tpu.memory_space<vmem>>, %arg5: memref<1x32x96xbf16, #tpu.memory_space<vmem>>, %arg6: memref<1x1x96xf32, #tpu.memory_space<vmem>>, %arg7: memref<1x32x32xbf16, #tpu.memory_space<vmem>>, %arg8: memref<1x1x32xf32, #tpu.memory_space<vmem>>, %arg9: memref<1x1x32xf32, #tpu.memory_space<vmem>>, %arg10: memref<1x1x32xf32, #tpu.memory_space<vmem>>, %arg11: memref<1x32x128xbf16, #tpu.memory_space<vmem>>, %arg12: memref<1x1x128xf32, #tpu.memory_space<vmem>>, %arg13: memref<1x128x32xbf16, #tpu.memory_space<vmem>>, %arg14: memref<1x1x32xf32, #tpu.memory_space<vmem>>, %arg15: memref<2x8x32xf32, #tpu.memory_space<vmem>>, %arg16: memref<16x32xf32, #tpu.memory_space<vmem>>, %arg17: memref<16x32xf32, #tpu.memory_space<vmem>>) attributes {dimension_semantics = [#tpu.dimension_semantics<parallel>, #tpu.dimension_semantics<arbitrary>], iteration_bounds = array<i64: 1, 2>, scalar_prefetch = 0 : i64, scratch_operands = 2 : i64, tpu.core_type = #tpu.core_type<tc>, window_params = [{transform_indices = @transform_0, window_bounds = array<i64: 2, 8, 32>}, {transform_indices = @transform_1, window_bounds = array<i64: 1, 1, 32>}, {transform_indices = @transform_2, window_bounds = array<i64: 1, 1, 32>}, {transform_indices = @transform_3, window_bounds = array<i64: 1, 32, 96>}, {transform_indices = @transform_4, window_bounds = array<i64: 1, 1, 96>}, {transform_indices = @transform_5, window_bounds = array<i64: 1, 32, 32>}, {transform_indices = @transform_6, window_bounds = array<i64: 1, 1, 32>}, {transform_indices = @transform_7, window_bounds = array<i64: 1, 1, 32>}, {transform_indices = @transform_8, window_bounds = array<i64: 1, 1, 32>}, {transform_indices = @transform_9, window_bounds = array<i64: 1, 32, 128>}, {transform_indices = @transform_10, window_bounds = array<i64: 1, 1, 128>}, {transform_indices = @transform_11, window_bounds = array<i64: 1, 128, 32>}, {transform_indices = @transform_12, window_bounds = array<i64: 1, 1, 32>}, {transform_indices = @transform_13, window_bounds = array<i64: 2, 8, 32>}]} {
    %c0_i32 = arith.constant 0 : i32
    %0 = arith.cmpi eq, %arg1, %c0_i32 : i32
    %1 = arith.extui %0 : i1 to i32
    %c0_i32_0 = arith.constant 0 : i32
    %2 = arith.cmpi ne, %1, %c0_i32_0 : i32
    scf.if %2 {
      %c0_85 = arith.constant 0 : index
      %c0_86 = arith.constant 0 : index
      %c0_87 = arith.constant 0 : index
      %225 = vector.load %arg2[%c0_85, %c0_86, %c0_87] : memref<2x8x32xf32, #tpu.memory_space<vmem>>, vector<2x8x32xf32>
      %226 = vector.shape_cast %225 : vector<2x8x32xf32> to vector<16x32xf32>
      %c0_88 = arith.constant 0 : index
      %c0_89 = arith.constant 0 : index
      %227 = vector.load %arg16[%c0_88, %c0_89] : memref<16x32xf32, #tpu.memory_space<vmem>>, vector<16x32xf32>
      tpu.vector_store %arg16[%c0_88, %c0_89], %226 {strides = array<i32>} : memref<16x32xf32, #tpu.memory_space<vmem>>, vector<16x32xf32>,
    } else {
    }
    %c0 = arith.constant 0 : index
    %c0_1 = arith.constant 0 : index
    %3 = vector.load %arg16[%c0, %c0_1] : memref<16x32xf32, #tpu.memory_space<vmem>>, vector<16x32xf32>
    %c0_2 = arith.constant 0 : index
    %c0_3 = arith.constant 0 : index
    %c0_4 = arith.constant 0 : index
    %4 = vector.load %arg3[%c0_2, %c0_3, %c0_4] : memref<1x1x32xf32, #tpu.memory_space<vmem>>, vector<1x1x32xf32>
    %5 = vector.shape_cast %4 : vector<1x1x32xf32> to vector<1x32xf32>
    %c0_5 = arith.constant 0 : index
    %c0_6 = arith.constant 0 : index
    %c0_7 = arith.constant 0 : index
    %6 = vector.load %arg4[%c0_5, %c0_6, %c0_7] : memref<1x1x32xf32, #tpu.memory_space<vmem>>, vector<1x1x32xf32>
    %7 = vector.shape_cast %6 : vector<1x1x32xf32> to vector<1x32xf32>
    %cst = arith.constant dense<0.000000e+00> : vector<16xf32>
    %8 = vector.multi_reduction <add>, %3, %cst [1] : vector<16x32xf32> to vector<16xf32>
    %9 = vector.shape_cast %8 : vector<16xf32> to vector<16x1xf32>
    %cst_8 = arith.constant 3.200000e+01 : f32
    %10 = vector.broadcast %cst_8 : f32 to vector<16x1xf32>
    %11 = arith.divf %9, %10 : vector<16x1xf32>
    %12 = vector.broadcast %11 : vector<16x1xf32> to vector<16x32xf32>
    %13 = arith.subf %3, %12 : vector<16x32xf32>
    %14 = arith.mulf %13, %13 : vector<16x32xf32>
    %cst_9 = arith.constant dense<0.000000e+00> : vector<16xf32>
    %15 = vector.multi_reduction <add>, %14, %cst_9 [1] : vector<16x32xf32> to vector<16xf32>
    %16 = vector.shape_cast %15 : vector<16xf32> to vector<16x1xf32>
    %cst_10 = arith.constant 3.200000e+01 : f32
    %17 = vector.broadcast %cst_10 : f32 to vector<16x1xf32>
    %18 = arith.divf %16, %17 : vector<16x1xf32>
    %19 = vector.broadcast %11 : vector<16x1xf32> to vector<16x32xf32>
    %20 = arith.subf %3, %19 : vector<16x32xf32>
    %cst_11 = arith.constant 9.99999974E-6 : f32
    %21 = vector.broadcast %cst_11 : f32 to vector<16x1xf32>
    %22 = arith.addf %18, %21 : vector<16x1xf32>
    %23 = math.rsqrt %22 : vector<16x1xf32>
    %24 = vector.broadcast %23 : vector<16x1xf32> to vector<16x32xf32>
    %25 = arith.mulf %20, %24 : vector<16x32xf32>
    %26 = vector.broadcast %5 : vector<1x32xf32> to vector<16x32xf32>
    %27 = arith.mulf %25, %26 : vector<16x32xf32>
    %28 = vector.broadcast %7 : vector<1x32xf32> to vector<16x32xf32>
    %29 = arith.addf %27, %28 : vector<16x32xf32>
    %30 = arith.truncf %29 : vector<16x32xf32> to vector<16x32xbf16>
    %c0_12 = arith.constant 0 : index
    %c0_13 = arith.constant 0 : index
    %c0_14 = arith.constant 0 : index
    %31 = vector.load %arg5[%c0_12, %c0_13, %c0_14] : memref<1x32x96xbf16, #tpu.memory_space<vmem>>, vector<1x32x96xbf16>
    %32 = vector.shape_cast %31 : vector<1x32x96xbf16> to vector<32x96xbf16>
    %cst_15 = arith.constant dense<0.000000e+00> : vector<16x96xf32>
    %33 = tpu.matmul %30, %32, %cst_15 {dimension_numbers = #tpu.dot_dimension_numbers<[1], [0], [0], [1], [0, 0, 1, 1], [], []>} : vector<16x32xbf16>, vector<32x96xbf16>, vector<16x96xf32> -> vector<16x96xf32>
    %c0_16 = arith.constant 0 : index
    %c0_17 = arith.constant 0 : index
    %c0_18 = arith.constant 0 : index
    %34 = vector.load %arg6[%c0_16, %c0_17, %c0_18] : memref<1x1x96xf32, #tpu.memory_space<vmem>>, vector<1x1x96xf32>
    %35 = vector.shape_cast %34 : vector<1x1x96xf32> to vector<1x96xf32>
    %36 = vector.broadcast %35 : vector<1x96xf32> to vector<16x96xf32>
    %37 = arith.addf %33, %36 : vector<16x96xf32>
    %38 = tpu.iota {dimensions = array<i32: 0>} : vector<8x8xi32>
    %39 = tpu.iota {dimensions = array<i32: 1>} : vector<8x8xi32>
    %40 = arith.cmpi sgt, %39, %38 : vector<8x8xi32>
    %cst_19 = arith.constant -1.000000e+09 : f32
    %cst_20 = arith.constant 0.000000e+00 : f32
    %41 = vector.broadcast %cst_19 : f32 to vector<8x8xf32>
    %42 = vector.broadcast %cst_20 : f32 to vector<8x8xf32>
    %43 = arith.select %40, %41, %42 : vector<8x8xi1>, vector<8x8xf32>
    %44 = vector.extract_strided_slice %37 {offsets = [0, 0], sizes = [16, 8], strides = [1, 1]} : vector<16x96xf32> to vector<16x8xf32>
    %cst_21 = arith.constant 0.353553385 : f32
    %45 = vector.broadcast %cst_21 : f32 to vector<16x8xf32>
    %46 = arith.mulf %44, %45 : vector<16x8xf32>
    %47 = vector.shape_cast %46 : vector<16x8xf32> to vector<2x8x8xf32>
    %48 = arith.truncf %47 : vector<2x8x8xf32> to vector<2x8x8xbf16>
    %49 = vector.extract_strided_slice %37 {offsets = [0, 32], sizes = [16, 8], strides = [1, 1]} : vector<16x96xf32> to vector<16x8xf32>
    %50 = vector.shape_cast %49 : vector<16x8xf32> to vector<2x8x8xf32>
    %51 = arith.truncf %50 : vector<2x8x8xf32> to vector<2x8x8xbf16>
    %52 = vector.extract_strided_slice %37 {offsets = [0, 64], sizes = [16, 8], strides = [1, 1]} : vector<16x96xf32> to vector<16x8xf32>
    %53 = vector.shape_cast %52 : vector<16x8xf32> to vector<2x8x8xf32>
    %54 = arith.truncf %53 : vector<2x8x8xf32> to vector<2x8x8xbf16>
    "tpu.trace_start"() <{level = 10 : i32, message = "bqd,bkd->bqk"}> : () -> ()
    %cst_22 = arith.constant dense<0.000000e+00> : vector<2x8x8xf32>
    %55 = tpu.matmul %48, %51, %cst_22 {dimension_numbers = #tpu.dot_dimension_numbers<[2], [2], [1], [1], [0, 0, 0, 1, 1, 1], [0], [0]>} : vector<2x8x8xbf16>, vector<2x8x8xbf16>, vector<2x8x8xf32> -> vector<2x8x8xf32>
    "tpu.trace_stop"() : () -> ()
    %56 = vector.shape_cast %43 : vector<8x8xf32> to vector<1x8x8xf32>
    %57 = vector.broadcast %56 : vector<1x8x8xf32> to vector<2x8x8xf32>
    %58 = arith.addf %55, %57 : vector<2x8x8xf32>
    %cst_23 = arith.constant dense<0xFF800000> : vector<2x8xf32>
    %59 = vector.multi_reduction <maximumf>, %58, %cst_23 [2] : vector<2x8x8xf32> to vector<2x8xf32>
    %60 = vector.shape_cast %59 : vector<2x8xf32> to vector<2x8x1xf32>
    %61 = vector.broadcast %60 : vector<2x8x1xf32> to vector<2x8x8xf32>
    %62 = arith.subf %58, %61 : vector<2x8x8xf32>
    %63 = math.exp %62 : vector<2x8x8xf32>
    %cst_24 = arith.constant dense<0.000000e+00> : vector<2x8xf32>
    %64 = vector.multi_reduction <add>, %63, %cst_24 [2] : vector<2x8x8xf32> to vector<2x8xf32>
    %65 = vector.shape_cast %64 : vector<2x8xf32> to vector<2x8x1xf32>
    %66 = tpu.reciprocal %65 {approx = true} : vector<2x8x1xf32> -> vector<2x8x1xf32>
    %67 = vector.broadcast %66 : vector<2x8x1xf32> to vector<2x8x8xf32>
    %68 = arith.mulf %63, %67 : vector<2x8x8xf32>
    %69 = arith.truncf %68 : vector<2x8x8xf32> to vector<2x8x8xbf16>
    "tpu.trace_start"() <{level = 10 : i32, message = "bqk,bkd->bqd"}> : () -> ()
    %cst_25 = arith.constant dense<0.000000e+00> : vector<2x8x8xf32>
    %70 = tpu.matmul %69, %54, %cst_25 {dimension_numbers = #tpu.dot_dimension_numbers<[2], [1], [1], [2], [0, 0, 0, 1, 1, 2], [0], [0]>} : vector<2x8x8xbf16>, vector<2x8x8xbf16>, vector<2x8x8xf32> -> vector<2x8x8xf32>
    "tpu.trace_stop"() : () -> ()
    %71 = vector.shape_cast %70 : vector<2x8x8xf32> to vector<16x8xf32>
    %c0_26 = arith.constant 0 : index
    %c0_27 = arith.constant 0 : index
    %72 = vector.load %arg17[%c0_26, %c0_27] : memref<16x32xf32, #tpu.memory_space<vmem>>, vector<16x8xf32>
    tpu.vector_store %arg17[%c0_26, %c0_27], %71 {strides = array<i32>} : memref<16x32xf32, #tpu.memory_space<vmem>>, vector<16x8xf32>,
    %73 = vector.extract_strided_slice %37 {offsets = [0, 8], sizes = [16, 8], strides = [1, 1]} : vector<16x96xf32> to vector<16x8xf32>
    %cst_28 = arith.constant 0.353553385 : f32
    %74 = vector.broadcast %cst_28 : f32 to vector<16x8xf32>
    %75 = arith.mulf %73, %74 : vector<16x8xf32>
    %76 = vector.shape_cast %75 : vector<16x8xf32> to vector<2x8x8xf32>
    %77 = arith.truncf %76 : vector<2x8x8xf32> to vector<2x8x8xbf16>
    %78 = vector.extract_strided_slice %37 {offsets = [0, 40], sizes = [16, 8], strides = [1, 1]} : vector<16x96xf32> to vector<16x8xf32>
    %79 = vector.shape_cast %78 : vector<16x8xf32> to vector<2x8x8xf32>
    %80 = arith.truncf %79 : vector<2x8x8xf32> to vector<2x8x8xbf16>
    %81 = vector.extract_strided_slice %37 {offsets = [0, 72], sizes = [16, 8], strides = [1, 1]} : vector<16x96xf32> to vector<16x8xf32>
    %82 = vector.shape_cast %81 : vector<16x8xf32> to vector<2x8x8xf32>
    %83 = arith.truncf %82 : vector<2x8x8xf32> to vector<2x8x8xbf16>
    "tpu.trace_start"() <{level = 10 : i32, message = "bqd,bkd->bqk"}> : () -> ()
    %cst_29 = arith.constant dense<0.000000e+00> : vector<2x8x8xf32>
    %84 = tpu.matmul %77, %80, %cst_29 {dimension_numbers = #tpu.dot_dimension_numbers<[2], [2], [1], [1], [0, 0, 0, 1, 1, 1], [0], [0]>} : vector<2x8x8xbf16>, vector<2x8x8xbf16>, vector<2x8x8xf32> -> vector<2x8x8xf32>
    "tpu.trace_stop"() : () -> ()
    %85 = vector.shape_cast %43 : vector<8x8xf32> to vector<1x8x8xf32>
    %86 = vector.broadcast %85 : vector<1x8x8xf32> to vector<2x8x8xf32>
    %87 = arith.addf %84, %86 : vector<2x8x8xf32>
    %cst_30 = arith.constant dense<0xFF800000> : vector<2x8xf32>
    %88 = vector.multi_reduction <maximumf>, %87, %cst_30 [2] : vector<2x8x8xf32> to vector<2x8xf32>
    %89 = vector.shape_cast %88 : vector<2x8xf32> to vector<2x8x1xf32>
    %90 = vector.broadcast %89 : vector<2x8x1xf32> to vector<2x8x8xf32>
    %91 = arith.subf %87, %90 : vector<2x8x8xf32>
    %92 = math.exp %91 : vector<2x8x8xf32>
    %cst_31 = arith.constant dense<0.000000e+00> : vector<2x8xf32>
    %93 = vector.multi_reduction <add>, %92, %cst_31 [2] : vector<2x8x8xf32> to vector<2x8xf32>
    %94 = vector.shape_cast %93 : vector<2x8xf32> to vector<2x8x1xf32>
    %95 = tpu.reciprocal %94 {approx = true} : vector<2x8x1xf32> -> vector<2x8x1xf32>
    %96 = vector.broadcast %95 : vector<2x8x1xf32> to vector<2x8x8xf32>
    %97 = arith.mulf %92, %96 : vector<2x8x8xf32>
    %98 = arith.truncf %97 : vector<2x8x8xf32> to vector<2x8x8xbf16>
    "tpu.trace_start"() <{level = 10 : i32, message = "bqk,bkd->bqd"}> : () -> ()
    %cst_32 = arith.constant dense<0.000000e+00> : vector<2x8x8xf32>
    %99 = tpu.matmul %98, %83, %cst_32 {dimension_numbers = #tpu.dot_dimension_numbers<[2], [1], [1], [2], [0, 0, 0, 1, 1, 2], [0], [0]>} : vector<2x8x8xbf16>, vector<2x8x8xbf16>, vector<2x8x8xf32> -> vector<2x8x8xf32>
    "tpu.trace_stop"() : () -> ()
    %100 = vector.shape_cast %99 : vector<2x8x8xf32> to vector<16x8xf32>
    %c0_33 = arith.constant 0 : index
    %c8 = arith.constant 8 : index
    %101 = vector.load %arg17[%c0_33, %c8] : memref<16x32xf32, #tpu.memory_space<vmem>>, vector<16x8xf32>
    tpu.vector_store %arg17[%c0_33, %c8], %100 {strides = array<i32>} : memref<16x32xf32, #tpu.memory_space<vmem>>, vector<16x8xf32>,
    %102 = vector.extract_strided_slice %37 {offsets = [0, 16], sizes = [16, 8], strides = [1, 1]} : vector<16x96xf32> to vector<16x8xf32>
    %cst_34 = arith.constant 0.353553385 : f32
    %103 = vector.broadcast %cst_34 : f32 to vector<16x8xf32>
    %104 = arith.mulf %102, %103 : vector<16x8xf32>
    %105 = vector.shape_cast %104 : vector<16x8xf32> to vector<2x8x8xf32>
    %106 = arith.truncf %105 : vector<2x8x8xf32> to vector<2x8x8xbf16>
    %107 = vector.extract_strided_slice %37 {offsets = [0, 48], sizes = [16, 8], strides = [1, 1]} : vector<16x96xf32> to vector<16x8xf32>
    %108 = vector.shape_cast %107 : vector<16x8xf32> to vector<2x8x8xf32>
    %109 = arith.truncf %108 : vector<2x8x8xf32> to vector<2x8x8xbf16>
    %110 = vector.extract_strided_slice %37 {offsets = [0, 80], sizes = [16, 8], strides = [1, 1]} : vector<16x96xf32> to vector<16x8xf32>
    %111 = vector.shape_cast %110 : vector<16x8xf32> to vector<2x8x8xf32>
    %112 = arith.truncf %111 : vector<2x8x8xf32> to vector<2x8x8xbf16>
    "tpu.trace_start"() <{level = 10 : i32, message = "bqd,bkd->bqk"}> : () -> ()
    %cst_35 = arith.constant dense<0.000000e+00> : vector<2x8x8xf32>
    %113 = tpu.matmul %106, %109, %cst_35 {dimension_numbers = #tpu.dot_dimension_numbers<[2], [2], [1], [1], [0, 0, 0, 1, 1, 1], [0], [0]>} : vector<2x8x8xbf16>, vector<2x8x8xbf16>, vector<2x8x8xf32> -> vector<2x8x8xf32>
    "tpu.trace_stop"() : () -> ()
    %114 = vector.shape_cast %43 : vector<8x8xf32> to vector<1x8x8xf32>
    %115 = vector.broadcast %114 : vector<1x8x8xf32> to vector<2x8x8xf32>
    %116 = arith.addf %113, %115 : vector<2x8x8xf32>
    %cst_36 = arith.constant dense<0xFF800000> : vector<2x8xf32>
    %117 = vector.multi_reduction <maximumf>, %116, %cst_36 [2] : vector<2x8x8xf32> to vector<2x8xf32>
    %118 = vector.shape_cast %117 : vector<2x8xf32> to vector<2x8x1xf32>
    %119 = vector.broadcast %118 : vector<2x8x1xf32> to vector<2x8x8xf32>
    %120 = arith.subf %116, %119 : vector<2x8x8xf32>
    %121 = math.exp %120 : vector<2x8x8xf32>
    %cst_37 = arith.constant dense<0.000000e+00> : vector<2x8xf32>
    %122 = vector.multi_reduction <add>, %121, %cst_37 [2] : vector<2x8x8xf32> to vector<2x8xf32>
    %123 = vector.shape_cast %122 : vector<2x8xf32> to vector<2x8x1xf32>
    %124 = tpu.reciprocal %123 {approx = true} : vector<2x8x1xf32> -> vector<2x8x1xf32>
    %125 = vector.broadcast %124 : vector<2x8x1xf32> to vector<2x8x8xf32>
    %126 = arith.mulf %121, %125 : vector<2x8x8xf32>
    %127 = arith.truncf %126 : vector<2x8x8xf32> to vector<2x8x8xbf16>
    "tpu.trace_start"() <{level = 10 : i32, message = "bqk,bkd->bqd"}> : () -> ()
    %cst_38 = arith.constant dense<0.000000e+00> : vector<2x8x8xf32>
    %128 = tpu.matmul %127, %112, %cst_38 {dimension_numbers = #tpu.dot_dimension_numbers<[2], [1], [1], [2], [0, 0, 0, 1, 1, 2], [0], [0]>} : vector<2x8x8xbf16>, vector<2x8x8xbf16>, vector<2x8x8xf32> -> vector<2x8x8xf32>
    "tpu.trace_stop"() : () -> ()
    %129 = vector.shape_cast %128 : vector<2x8x8xf32> to vector<16x8xf32>
    %c0_39 = arith.constant 0 : index
    %c16 = arith.constant 16 : index
    %130 = vector.load %arg17[%c0_39, %c16] : memref<16x32xf32, #tpu.memory_space<vmem>>, vector<16x8xf32>
    tpu.vector_store %arg17[%c0_39, %c16], %129 {strides = array<i32>} : memref<16x32xf32, #tpu.memory_space<vmem>>, vector<16x8xf32>,
    %131 = vector.extract_strided_slice %37 {offsets = [0, 24], sizes = [16, 8], strides = [1, 1]} : vector<16x96xf32> to vector<16x8xf32>
    %cst_40 = arith.constant 0.353553385 : f32
    %132 = vector.broadcast %cst_40 : f32 to vector<16x8xf32>
    %133 = arith.mulf %131, %132 : vector<16x8xf32>
    %134 = vector.shape_cast %133 : vector<16x8xf32> to vector<2x8x8xf32>
    %135 = arith.truncf %134 : vector<2x8x8xf32> to vector<2x8x8xbf16>
    %136 = vector.extract_strided_slice %37 {offsets = [0, 56], sizes = [16, 8], strides = [1, 1]} : vector<16x96xf32> to vector<16x8xf32>
    %137 = vector.shape_cast %136 : vector<16x8xf32> to vector<2x8x8xf32>
    %138 = arith.truncf %137 : vector<2x8x8xf32> to vector<2x8x8xbf16>
    %139 = vector.extract_strided_slice %37 {offsets = [0, 88], sizes = [16, 8], strides = [1, 1]} : vector<16x96xf32> to vector<16x8xf32>
    %140 = vector.shape_cast %139 : vector<16x8xf32> to vector<2x8x8xf32>
    %141 = arith.truncf %140 : vector<2x8x8xf32> to vector<2x8x8xbf16>
    "tpu.trace_start"() <{level = 10 : i32, message = "bqd,bkd->bqk"}> : () -> ()
    %cst_41 = arith.constant dense<0.000000e+00> : vector<2x8x8xf32>
    %142 = tpu.matmul %135, %138, %cst_41 {dimension_numbers = #tpu.dot_dimension_numbers<[2], [2], [1], [1], [0, 0, 0, 1, 1, 1], [0], [0]>} : vector<2x8x8xbf16>, vector<2x8x8xbf16>, vector<2x8x8xf32> -> vector<2x8x8xf32>
    "tpu.trace_stop"() : () -> ()
    %143 = vector.shape_cast %43 : vector<8x8xf32> to vector<1x8x8xf32>
    %144 = vector.broadcast %143 : vector<1x8x8xf32> to vector<2x8x8xf32>
    %145 = arith.addf %142, %144 : vector<2x8x8xf32>
    %cst_42 = arith.constant dense<0xFF800000> : vector<2x8xf32>
    %146 = vector.multi_reduction <maximumf>, %145, %cst_42 [2] : vector<2x8x8xf32> to vector<2x8xf32>
    %147 = vector.shape_cast %146 : vector<2x8xf32> to vector<2x8x1xf32>
    %148 = vector.broadcast %147 : vector<2x8x1xf32> to vector<2x8x8xf32>
    %149 = arith.subf %145, %148 : vector<2x8x8xf32>
    %150 = math.exp %149 : vector<2x8x8xf32>
    %cst_43 = arith.constant dense<0.000000e+00> : vector<2x8xf32>
    %151 = vector.multi_reduction <add>, %150, %cst_43 [2] : vector<2x8x8xf32> to vector<2x8xf32>
    %152 = vector.shape_cast %151 : vector<2x8xf32> to vector<2x8x1xf32>
    %153 = tpu.reciprocal %152 {approx = true} : vector<2x8x1xf32> -> vector<2x8x1xf32>
    %154 = vector.broadcast %153 : vector<2x8x1xf32> to vector<2x8x8xf32>
    %155 = arith.mulf %150, %154 : vector<2x8x8xf32>
    %156 = arith.truncf %155 : vector<2x8x8xf32> to vector<2x8x8xbf16>
    "tpu.trace_start"() <{level = 10 : i32, message = "bqk,bkd->bqd"}> : () -> ()
    %cst_44 = arith.constant dense<0.000000e+00> : vector<2x8x8xf32>
    %157 = tpu.matmul %156, %141, %cst_44 {dimension_numbers = #tpu.dot_dimension_numbers<[2], [1], [1], [2], [0, 0, 0, 1, 1, 2], [0], [0]>} : vector<2x8x8xbf16>, vector<2x8x8xbf16>, vector<2x8x8xf32> -> vector<2x8x8xf32>
    "tpu.trace_stop"() : () -> ()
    %158 = vector.shape_cast %157 : vector<2x8x8xf32> to vector<16x8xf32>
    %c0_45 = arith.constant 0 : index
    %c24 = arith.constant 24 : index
    %159 = vector.load %arg17[%c0_45, %c24] : memref<16x32xf32, #tpu.memory_space<vmem>>, vector<16x8xf32>
    tpu.vector_store %arg17[%c0_45, %c24], %158 {strides = array<i32>} : memref<16x32xf32, #tpu.memory_space<vmem>>, vector<16x8xf32>,
    %c0_46 = arith.constant 0 : index
    %c0_47 = arith.constant 0 : index
    %160 = vector.load %arg17[%c0_46, %c0_47] : memref<16x32xf32, #tpu.memory_space<vmem>>, vector<16x32xf32>
    %161 = arith.truncf %160 : vector<16x32xf32> to vector<16x32xbf16>
    %c0_48 = arith.constant 0 : index
    %c0_49 = arith.constant 0 : index
    %c0_50 = arith.constant 0 : index
    %162 = vector.load %arg7[%c0_48, %c0_49, %c0_50] : memref<1x32x32xbf16, #tpu.memory_space<vmem>>, vector<1x32x32xbf16>
    %163 = vector.shape_cast %162 : vector<1x32x32xbf16> to vector<32x32xbf16>
    %cst_51 = arith.constant dense<0.000000e+00> : vector<16x32xf32>
    %164 = tpu.matmul %161, %163, %cst_51 {dimension_numbers = #tpu.dot_dimension_numbers<[1], [0], [0], [1], [0, 0, 1, 1], [], []>} : vector<16x32xbf16>, vector<32x32xbf16>, vector<16x32xf32> -> vector<16x32xf32>
    %c0_52 = arith.constant 0 : index
    %c0_53 = arith.constant 0 : index
    %c0_54 = arith.constant 0 : index
    %165 = vector.load %arg8[%c0_52, %c0_53, %c0_54] : memref<1x1x32xf32, #tpu.memory_space<vmem>>, vector<1x1x32xf32>
    %166 = vector.shape_cast %165 : vector<1x1x32xf32> to vector<1x32xf32>
    %167 = vector.broadcast %166 : vector<1x32xf32> to vector<16x32xf32>
    %168 = arith.addf %164, %167 : vector<16x32xf32>
    %169 = arith.addf %3, %168 : vector<16x32xf32>
    %c0_55 = arith.constant 0 : index
    %c0_56 = arith.constant 0 : index
    %c0_57 = arith.constant 0 : index
    %170 = vector.load %arg9[%c0_55, %c0_56, %c0_57] : memref<1x1x32xf32, #tpu.memory_space<vmem>>, vector<1x1x32xf32>
    %171 = vector.shape_cast %170 : vector<1x1x32xf32> to vector<1x32xf32>
    %c0_58 = arith.constant 0 : index
    %c0_59 = arith.constant 0 : index
    %c0_60 = arith.constant 0 : index
    %172 = vector.load %arg10[%c0_58, %c0_59, %c0_60] : memref<1x1x32xf32, #tpu.memory_space<vmem>>, vector<1x1x32xf32>
    %173 = vector.shape_cast %172 : vector<1x1x32xf32> to vector<1x32xf32>
    %cst_61 = arith.constant dense<0.000000e+00> : vector<16xf32>
    %174 = vector.multi_reduction <add>, %169, %cst_61 [1] : vector<16x32xf32> to vector<16xf32>
    %175 = vector.shape_cast %174 : vector<16xf32> to vector<16x1xf32>
    %cst_62 = arith.constant 3.200000e+01 : f32
    %176 = vector.broadcast %cst_62 : f32 to vector<16x1xf32>
    %177 = arith.divf %175, %176 : vector<16x1xf32>
    %178 = vector.broadcast %177 : vector<16x1xf32> to vector<16x32xf32>
    %179 = arith.subf %169, %178 : vector<16x32xf32>
    %180 = arith.mulf %179, %179 : vector<16x32xf32>
    %cst_63 = arith.constant dense<0.000000e+00> : vector<16xf32>
    %181 = vector.multi_reduction <add>, %180, %cst_63 [1] : vector<16x32xf32> to vector<16xf32>
    %182 = vector.shape_cast %181 : vector<16xf32> to vector<16x1xf32>
    %cst_64 = arith.constant 3.200000e+01 : f32
    %183 = vector.broadcast %cst_64 : f32 to vector<16x1xf32>
    %184 = arith.divf %182, %183 : vector<16x1xf32>
    %185 = vector.broadcast %177 : vector<16x1xf32> to vector<16x32xf32>
    %186 = arith.subf %169, %185 : vector<16x32xf32>
    %cst_65 = arith.constant 9.99999974E-6 : f32
    %187 = vector.broadcast %cst_65 : f32 to vector<16x1xf32>
    %188 = arith.addf %184, %187 : vector<16x1xf32>
    %189 = math.rsqrt %188 : vector<16x1xf32>
    %190 = vector.broadcast %189 : vector<16x1xf32> to vector<16x32xf32>
    %191 = arith.mulf %186, %190 : vector<16x32xf32>
    %192 = vector.broadcast %171 : vector<1x32xf32> to vector<16x32xf32>
    %193 = arith.mulf %191, %192 : vector<16x32xf32>
    %194 = vector.broadcast %173 : vector<1x32xf32> to vector<16x32xf32>
    %195 = arith.addf %193, %194 : vector<16x32xf32>
    %196 = arith.truncf %195 : vector<16x32xf32> to vector<16x32xbf16>
    %c0_66 = arith.constant 0 : index
    %c0_67 = arith.constant 0 : index
    %c0_68 = arith.constant 0 : index
    %197 = vector.load %arg11[%c0_66, %c0_67, %c0_68] : memref<1x32x128xbf16, #tpu.memory_space<vmem>>, vector<1x32x128xbf16>
    %198 = vector.shape_cast %197 : vector<1x32x128xbf16> to vector<32x128xbf16>
    %cst_69 = arith.constant dense<0.000000e+00> : vector<16x128xf32>
    %199 = tpu.matmul %196, %198, %cst_69 {dimension_numbers = #tpu.dot_dimension_numbers<[1], [0], [0], [1], [0, 0, 1, 1], [], []>} : vector<16x32xbf16>, vector<32x128xbf16>, vector<16x128xf32> -> vector<16x128xf32>
    %c0_70 = arith.constant 0 : index
    %c0_71 = arith.constant 0 : index
    %c0_72 = arith.constant 0 : index
    %200 = vector.load %arg12[%c0_70, %c0_71, %c0_72] : memref<1x1x128xf32, #tpu.memory_space<vmem>>, vector<1x1x128xf32>
    %201 = vector.shape_cast %200 : vector<1x1x128xf32> to vector<1x128xf32>
    %202 = vector.broadcast %201 : vector<1x128xf32> to vector<16x128xf32>
    %203 = arith.addf %199, %202 : vector<16x128xf32>
    %cst_73 = arith.constant 1.702000e+00 : f32
    %204 = vector.broadcast %cst_73 : f32 to vector<16x128xf32>
    %205 = arith.mulf %204, %203 : vector<16x128xf32>
    %206 = arith.negf %205 : vector<16x128xf32>
    %207 = math.exp %206 : vector<16x128xf32>
    %cst_74 = arith.constant 1.000000e+00 : f32
    %208 = vector.broadcast %cst_74 : f32 to vector<16x128xf32>
    %209 = arith.addf %208, %207 : vector<16x128xf32>
    %210 = arith.divf %208, %209 : vector<16x128xf32>
    %211 = arith.mulf %203, %210 : vector<16x128xf32>
    %212 = arith.truncf %211 : vector<16x128xf32> to vector<16x128xbf16>
    %c0_75 = arith.constant 0 : index
    %c0_76 = arith.constant 0 : index
    %c0_77 = arith.constant 0 : index
    %213 = vector.load %arg13[%c0_75, %c0_76, %c0_77] : memref<1x128x32xbf16, #tpu.memory_space<vmem>>, vector<1x128x32xbf16>
    %214 = vector.shape_cast %213 : vector<1x128x32xbf16> to vector<128x32xbf16>
    %cst_78 = arith.constant dense<0.000000e+00> : vector<16x32xf32>
    %215 = tpu.matmul %212, %214, %cst_78 {dimension_numbers = #tpu.dot_dimension_numbers<[1], [0], [0], [1], [0, 0, 1, 1], [], []>} : vector<16x128xbf16>, vector<128x32xbf16>, vector<16x32xf32> -> vector<16x32xf32>
    %c0_79 = arith.constant 0 : index
    %c0_80 = arith.constant 0 : index
    %c0_81 = arith.constant 0 : index
    %216 = vector.load %arg14[%c0_79, %c0_80, %c0_81] : memref<1x1x32xf32, #tpu.memory_space<vmem>>, vector<1x1x32xf32>
    %217 = vector.shape_cast %216 : vector<1x1x32xf32> to vector<1x32xf32>
    %218 = vector.broadcast %217 : vector<1x32xf32> to vector<16x32xf32>
    %219 = arith.addf %215, %218 : vector<16x32xf32>
    %220 = arith.addf %169, %219 : vector<16x32xf32>
    %c0_82 = arith.constant 0 : index
    %c0_83 = arith.constant 0 : index
    %221 = vector.load %arg16[%c0_82, %c0_83] : memref<16x32xf32, #tpu.memory_space<vmem>>, vector<16x32xf32>
    tpu.vector_store %arg16[%c0_82, %c0_83], %220 {strides = array<i32>} : memref<16x32xf32, #tpu.memory_space<vmem>>, vector<16x32xf32>,
    %c1_i32 = arith.constant 1 : i32
    %222 = arith.cmpi eq, %arg1, %c1_i32 : i32
    %223 = arith.extui %222 : i1 to i32
    %c0_i32_84 = arith.constant 0 : i32
    %224 = arith.cmpi ne, %223, %c0_i32_84 : i32
    scf.if %224 {
      %225 = vector.shape_cast %220 : vector<16x32xf32> to vector<2x8x32xf32>
      %c0_85 = arith.constant 0 : index
      %c0_86 = arith.constant 0 : index
      %c0_87 = arith.constant 0 : index
      %226 = vector.load %arg15[%c0_85, %c0_86, %c0_87] : memref<2x8x32xf32, #tpu.memory_space<vmem>>, vector<2x8x32xf32>
      tpu.vector_store %arg15[%c0_85, %c0_86, %c0_87], %225 {strides = array<i32>} : memref<2x8x32xf32, #tpu.memory_space<vmem>>, vector<2x8x32xf32>,
    } else {
    }
    return
  }
  func.func @transform_0(%arg0: i32, %arg1: i32) -> (i32, i32, i32) {
    %c0_i32 = arith.constant 0 : i32
    %c0_i32_0 = arith.constant 0 : i32
    %c0_i32_1 = arith.constant 0 : i32
    return %arg0, %c0_i32, %c0_i32_0 : i32, i32, i32
  }
  func.func @transform_1(%arg0: i32, %arg1: i32) -> (i32, i32, i32) {
    %c0_i32 = arith.constant 0 : i32
    %c0_i32_0 = arith.constant 0 : i32
    %c0_i32_1 = arith.constant 0 : i32
    return %arg1, %c0_i32, %c0_i32_0 : i32, i32, i32
  }
  func.func @transform_2(%arg0: i32, %arg1: i32) -> (i32, i32, i32) {
    %c0_i32 = arith.constant 0 : i32
    %c0_i32_0 = arith.constant 0 : i32
    %c0_i32_1 = arith.constant 0 : i32
    return %arg1, %c0_i32, %c0_i32_0 : i32, i32, i32
  }
  func.func @transform_3(%arg0: i32, %arg1: i32) -> (i32, i32, i32) {
    %c0_i32 = arith.constant 0 : i32
    %c0_i32_0 = arith.constant 0 : i32
    %c0_i32_1 = arith.constant 0 : i32
    return %arg1, %c0_i32, %c0_i32_0 : i32, i32, i32
  }
  func.func @transform_4(%arg0: i32, %arg1: i32) -> (i32, i32, i32) {
    %c0_i32 = arith.constant 0 : i32
    %c0_i32_0 = arith.constant 0 : i32
    %c0_i32_1 = arith.constant 0 : i32
    return %arg1, %c0_i32, %c0_i32_0 : i32, i32, i32
  }
  func.func @transform_5(%arg0: i32, %arg1: i32) -> (i32, i32, i32) {
    %c0_i32 = arith.constant 0 : i32
    %c0_i32_0 = arith.constant 0 : i32
    %c0_i32_1 = arith.constant 0 : i32
    return %arg1, %c0_i32, %c0_i32_0 : i32, i32, i32
  }
  func.func @transform_6(%arg0: i32, %arg1: i32) -> (i32, i32, i32) {
    %c0_i32 = arith.constant 0 : i32
    %c0_i32_0 = arith.constant 0 : i32
    %c0_i32_1 = arith.constant 0 : i32
    return %arg1, %c0_i32, %c0_i32_0 : i32, i32, i32
  }
  func.func @transform_7(%arg0: i32, %arg1: i32) -> (i32, i32, i32) {
    %c0_i32 = arith.constant 0 : i32
    %c0_i32_0 = arith.constant 0 : i32
    %c0_i32_1 = arith.constant 0 : i32
    return %arg1, %c0_i32, %c0_i32_0 : i32, i32, i32
  }
  func.func @transform_8(%arg0: i32, %arg1: i32) -> (i32, i32, i32) {
    %c0_i32 = arith.constant 0 : i32
    %c0_i32_0 = arith.constant 0 : i32
    %c0_i32_1 = arith.constant 0 : i32
    return %arg1, %c0_i32, %c0_i32_0 : i32, i32, i32
  }
  func.func @transform_9(%arg0: i32, %arg1: i32) -> (i32, i32, i32) {
    %c0_i32 = arith.constant 0 : i32
    %c0_i32_0 = arith.constant 0 : i32
    %c0_i32_1 = arith.constant 0 : i32
    return %arg1, %c0_i32, %c0_i32_0 : i32, i32, i32
  }
  func.func @transform_10(%arg0: i32, %arg1: i32) -> (i32, i32, i32) {
    %c0_i32 = arith.constant 0 : i32
    %c0_i32_0 = arith.constant 0 : i32
    %c0_i32_1 = arith.constant 0 : i32
    return %arg1, %c0_i32, %c0_i32_0 : i32, i32, i32
  }
  func.func @transform_11(%arg0: i32, %arg1: i32) -> (i32, i32, i32) {
    %c0_i32 = arith.constant 0 : i32
    %c0_i32_0 = arith.constant 0 : i32
    %c0_i32_1 = arith.constant 0 : i32
    return %arg1, %c0_i32, %c0_i32_0 : i32, i32, i32
  }
  func.func @transform_12(%arg0: i32, %arg1: i32) -> (i32, i32, i32) {
    %c0_i32 = arith.constant 0 : i32
    %c0_i32_0 = arith.constant 0 : i32
    %c0_i32_1 = arith.constant 0 : i32
    return %arg1, %c0_i32, %c0_i32_0 : i32, i32, i32
  }
  func.func @transform_13(%arg0: i32, %arg1: i32) -> (i32, i32, i32) {
    %c0_i32 = arith.constant 0 : i32
    %c0_i32_0 = arith.constant 0 : i32
    %c0_i32_1 = arith.constant 0 : i32
    return %arg0, %c0_i32, %c0_i32_0 : i32, i32, i32
  }
}

</mosaic_0001>

<llo_original>
// kernel: tpu_custom_call.1
$region0: #{tpu_custom_call.1}
  #allocation0 [shape = 'u32[]', space=smem, size = 0x4, offset = 0x4, fixed_abs, tag = 'smem constant byte address 0x4 - core index']
  #allocation1 [shape = 'u32[72,128]{1,0:T(1,128)}', space=vmem, size = 0x9000, scoped, tag = 'internal scratch']
  #allocation2 [shape = 'f32[16,32]{1,0:T(8,128)}', space=vmem, size = 0x2000, scoped, tag = 'scratch operand']
  #allocation3 [shape = 'f32[16,32]{1,0:T(8,128)}', space=vmem, size = 0x2000, scoped, tag = 'scratch operand']
  %s0 = inlined_call_operand.vmem [shape: f32[2,8,32], index: 0, kind: input, shape index: {}]
  %s1 = inlined_call_operand.vmem [shape: f32[2,1,32], index: 1, kind: input, shape index: {}]
  %s2 = inlined_call_operand.vmem [shape: f32[2,1,32], index: 2, kind: input, shape index: {}]
  %s3 = inlined_call_operand.vmem [shape: bf16[2,32,96], index: 3, kind: input, shape index: {}]
  %s4 = inlined_call_operand.vmem [shape: f32[2,1,96], index: 4, kind: input, shape index: {}]
  %s5 = inlined_call_operand.vmem [shape: bf16[2,32,32], index: 5, kind: input, shape index: {}]
  %s6 = inlined_call_operand.vmem [shape: f32[2,1,32], index: 6, kind: input, shape index: {}]
  %s7 = inlined_call_operand.vmem [shape: f32[2,1,32], index: 7, kind: input, shape index: {}]
  %s8 = inlined_call_operand.vmem [shape: f32[2,1,32], index: 8, kind: input, shape index: {}]
  %s9 = inlined_call_operand.vmem [shape: bf16[2,32,128], index: 9, kind: input, shape index: {}]
  %s10 = inlined_call_operand.vmem [shape: f32[2,1,128], index: 10, kind: input, shape index: {}]
  %s11 = inlined_call_operand.vmem [shape: bf16[2,128,32], index: 11, kind: input, shape index: {}]
  %s12 = inlined_call_operand.vmem [shape: f32[2,1,32], index: 12, kind: input, shape index: {}]
  %s13 = inlined_call_operand.hbm [shape: f32[2,8,32], index: 13, kind: output, shape index: {}]
  %s14 = sld [smem:[#allocation0]]
  $region93: #{tpu_custom_call.1} parent=0
    _
  %s16 = ssub.s32 1, %s14
  %s17 = scalar_select 0, %s16, %s14
  $region1: #{tpu_custom_call.1} parent=0
    #allocation4 [shape = 'u8[8192]{0}', space=vmem, size = 0x2000, scoped, tag = 'output window, operand 0, single buffered']
    #allocation5 [shape = 's32[2]{0}', space=sflag, size = 0x8, scoped, tag = 'scoped memory for tpu_custom_call.1']
    %18 = vsyncpa [#allocation5], 0
    loop: start=0, step=1, limit=4
    $region2: #{tpu_custom_call.1} parent=1 // loop_pre_header
      _
    $region3: #{tpu_custom_call.1} parent=1 // loop_header
      %s20 = sphi 0, %s24
      %p21 = scmp.ge.s32.totalorder %s20, 4
      %s27 = sphi 0, %s39
      %s28 = sphi 0, %s35
      %s29 = sphi 0, %s27
      %s30 = sphi 0, %s28
      %s31 = sphi 0, %s29
      %s32 = sphi 0, %s30
      %s42 = sphi 0, %s44
      %s45 = sphi 0, %s42
      %s46 = sphi 0, %s45
      %s62 = sphi 0, %s46
      %s68 = sphi 0, %s70
      %s71 = sphi 0, %s68
      %s72 = sphi 0, %s71
      %s88 = sphi 0, %s72
      %s94 = sphi 0, %s96
      %s97 = sphi 0, %s94
      %s98 = sphi 0, %s97
      %s114 = sphi 0, %s98
      %s120 = sphi 0, %s122
      %s123 = sphi 0, %s120
      %s124 = sphi 0, %s123
      %s140 = sphi 0, %s124
      %s146 = sphi 0, %s148
      %s149 = sphi 0, %s146
      %s150 = sphi 0, %s149
      %s166 = sphi 0, %s150
      %s172 = sphi 0, %s174
      %s175 = sphi 0, %s172
      %s176 = sphi 0, %s175
      %s192 = sphi 0, %s176
      %s198 = sphi 0, %s200
      %s201 = sphi 0, %s198
      %s202 = sphi 0, %s201
      %s218 = sphi 0, %s202
      %s224 = sphi 0, %s226
      %s227 = sphi 0, %s224
      %s228 = sphi 0, %s227
      %s244 = sphi 0, %s228
      %s250 = sphi 0, %s252
      %s253 = sphi 0, %s250
      %s254 = sphi 0, %s253
      %s270 = sphi 0, %s254
      %s276 = sphi 0, %s278
      %s279 = sphi 0, %s276
      %s280 = sphi 0, %s279
      %s296 = sphi 0, %s280
      %s302 = sphi 0, %s304
      %s305 = sphi 0, %s302
      %s306 = sphi 0, %s305
      %s322 = sphi 0, %s306
      %s328 = sphi 0, %s330
      %s331 = sphi 0, %s328
      %s332 = sphi 0, %s331
      %s348 = sphi 0, %s332
      %s354 = sphi 0, %s356
      %s357 = sphi 0, %s354
      %s358 = sphi 0, %s357
      %s374 = sphi 0, %s358
      %s380 = sphi 0, %s382
      %s383 = sphi 0, %s380
      %s384 = sphi 0, %s383
      %s400 = sphi 0, %s384
    $region4: #{tpu_custom_call.1} parent=1 // loop_header_branch
      %23 = sbr.rel (%p21) target = $region8
    $region5: #{tpu_custom_call.1} parent=1 // loop_body
      %s25 = ssub.s32 %s20, 1
      %s26 = ssub.s32 %s20, 2
      %s33 = sadd.s32 1, %s28
      %p34 = scmp.ge.s32.totalorder %s33, 2
      %s35 = scalar_select %p34, 0, %s33
      %s36 = sadd.s32 1, %s27
      %s37 = scalar_select %p34, %s36, %s27
      %p38 = scmp.ge.s32.totalorder %s37, 1
      %s39 = scalar_select %p38, 0, %s37
      %s40 = ssub.s32 %s27, %s39
      %p41 = scmp.eq.s32.totalorder %s40, 0
      %s43 = sadd.s32 %s42, 1
      %s44 = scalar_select %p41, %s42, %s43
      %p47 = pneg %p41
      %p48 = scmp.eq.s32.totalorder %s20, 1
      %p49 = por %p47, %p48
      %p50 = scmp.ne.s32.totalorder %s42, %s45
      %p51 = scmp.eq.s32.totalorder %s20, 0
      %p52 = por %p50, %p51
      %p53 = scmp.ne.s32.totalorder %s42, %s45
      %p54 = scmp.eq.s32.totalorder %s25, 1
      %p55 = por %p53, %p54
      %p56 = scmp.ne.s32.totalorder %s45, %s46
      %p57 = scmp.eq.s32.totalorder %s25, 0
      %p58 = por %p56, %p57
      %p59 = scmp.ne.s32.totalorder %s45, %s46
      %p60 = scmp.eq.s32.totalorder %s26, 1
      %p61 = por %p59, %p60
      %p63 = scmp.ne.s32.totalorder %s46, %s62
      %p64 = scmp.eq.s32.totalorder %s26, 0
      %p65 = por %p63, %p64
      %s66 = ssub.s32 %s28, %s35
      %p67 = scmp.eq.s32.totalorder %s66, 0
      %s69 = sadd.s32 %s68, 1
      %s70 = scalar_select %p67, %s68, %s69
      %p73 = pneg %p67
      %p74 = scmp.eq.s32.totalorder %s20, 1
      %p75 = por %p73, %p74
      %p76 = scmp.ne.s32.totalorder %s68, %s71
      %p77 = scmp.eq.s32.totalorder %s20, 0
      %p78 = por %p76, %p77
      %p79 = scmp.ne.s32.totalorder %s68, %s71
      %p80 = scmp.eq.s32.totalorder %s25, 1
      %p81 = por %p79, %p80
      %p82 = scmp.ne.s32.totalorder %s71, %s72
      %p83 = scmp.eq.s32.totalorder %s25, 0
      %p84 = por %p82, %p83
      %p85 = scmp.ne.s32.totalorder %s71, %s72
      %p86 = scmp.eq.s32.totalorder %s26, 1
      %p87 = por %p85, %p86
      %p89 = scmp.ne.s32.totalorder %s72, %s88
      %p90 = scmp.eq.s32.totalorder %s26, 0
      %p91 = por %p89, %p90
      %s92 = ssub.s32 %s28, %s35
      %p93 = scmp.eq.s32.totalorder %s92, 0
      %s95 = sadd.s32 %s94, 1
      %s96 = scalar_select %p93, %s94, %s95
      %p99 = pneg %p93
      %p100 = scmp.eq.s32.totalorder %s20, 1
      %p101 = por %p99, %p100
      %p102 = scmp.ne.s32.totalorder %s94, %s97
      %p103 = scmp.eq.s32.totalorder %s20, 0
      %p104 = por %p102, %p103
      %p105 = scmp.ne.s32.totalorder %s94, %s97
      %p106 = scmp.eq.s32.totalorder %s25, 1
      %p107 = por %p105, %p106
      %p108 = scmp.ne.s32.totalorder %s97, %s98
      %p109 = scmp.eq.s32.totalorder %s25, 0
      %p110 = por %p108, %p109
      %p111 = scmp.ne.s32.totalorder %s97, %s98
      %p112 = scmp.eq.s32.totalorder %s26, 1
      %p113 = por %p111, %p112
      %p115 = scmp.ne.s32.totalorder %s98, %s114
      %p116 = scmp.eq.s32.totalorder %s26, 0
      %p117 = por %p115, %p116
      %s118 = ssub.s32 %s28, %s35
      %p119 = scmp.eq.s32.totalorder %s118, 0
      %s121 = sadd.s32 %s120, 1
      %s122 = scalar_select %p119, %s120, %s121
      %p125 = pneg %p119
      %p126 = scmp.eq.s32.totalorder %s20, 1
      %p127 = por %p125, %p126
      %p128 = scmp.ne.s32.totalorder %s120, %s123
      %p129 = scmp.eq.s32.totalorder %s20, 0
      %p130 = por %p128, %p129
      %p131 = scmp.ne.s32.totalorder %s120, %s123
      %p132 = scmp.eq.s32.totalorder %s25, 1
      %p133 = por %p131, %p132
      %p134 = scmp.ne.s32.totalorder %s123, %s124
      %p135 = scmp.eq.s32.totalorder %s25, 0
      %p136 = por %p134, %p135
      %p137 = scmp.ne.s32.totalorder %s123, %s124
      %p138 = scmp.eq.s32.totalorder %s26, 1
      %p139 = por %p137, %p138
      %p141 = scmp.ne.s32.totalorder %s124, %s140
      %p142 = scmp.eq.s32.totalorder %s26, 0
      %p143 = por %p141, %p142
      %s144 = ssub.s32 %s28, %s35
      %p145 = scmp.eq.s32.totalorder %s144, 0
      %s147 = sadd.s32 %s146, 1
      %s148 = scalar_select %p145, %s146, %s147
      %p151 = pneg %p145
      %p152 = scmp.eq.s32.totalorder %s20, 1
      %p153 = por %p151, %p152
      %p154 = scmp.ne.s32.totalorder %s146, %s149
      %p155 = scmp.eq.s32.totalorder %s20, 0
      %p156 = por %p154, %p155
      %p157 = scmp.ne.s32.totalorder %s146, %s149
      %p158 = scmp.eq.s32.totalorder %s25, 1
      %p159 = por %p157, %p158
      %p160 = scmp.ne.s32.totalorder %s149, %s150
      %p161 = scmp.eq.s32.totalorder %s25, 0
      %p162 = por %p160, %p161
      %p163 = scmp.ne.s32.totalorder %s149, %s150
      %p164 = scmp.eq.s32.totalorder %s26, 1
      %p165 = por %p163, %p164
      %p167 = scmp.ne.s32.totalorder %s150, %s166
      %p168 = scmp.eq.s32.totalorder %s26, 0
      %p169 = por %p167, %p168
      %s170 = ssub.s32 %s28, %s35
      %p171 = scmp.eq.s32.totalorder %s170, 0
      %s173 = sadd.s32 %s172, 1
      %s174 = scalar_select %p171, %s172, %s173
      %p177 = pneg %p171
      %p178 = scmp.eq.s32.totalorder %s20, 1
      %p179 = por %p177, %p178
      %p180 = scmp.ne.s32.totalorder %s172, %s175
      %p181 = scmp.eq.s32.totalorder %s20, 0
      %p182 = por %p180, %p181
      %p183 = scmp.ne.s32.totalorder %s172, %s175
      %p184 = scmp.eq.s32.totalorder %s25, 1
      %p185 = por %p183, %p184
      %p186 = scmp.ne.s32.totalorder %s175, %s176
      %p187 = scmp.eq.s32.totalorder %s25, 0
      %p188 = por %p186, %p187
      %p189 = scmp.ne.s32.totalorder %s175, %s176
      %p190 = scmp.eq.s32.totalorder %s26, 1
      %p191 = por %p189, %p190
      %p193 = scmp.ne.s32.totalorder %s176, %s192
      %p194 = scmp.eq.s32.totalorder %s26, 0
      %p195 = por %p193, %p194
      %s196 = ssub.s32 %s28, %s35
      %p197 = scmp.eq.s32.totalorder %s196, 0
      %s199 = sadd.s32 %s198, 1
      %s200 = scalar_select %p197, %s198, %s199
      %p203 = pneg %p197
      %p204 = scmp.eq.s32.totalorder %s20, 1
      %p205 = por %p203, %p204
      %p206 = scmp.ne.s32.totalorder %s198, %s201
      %p207 = scmp.eq.s32.totalorder %s20, 0
      %p208 = por %p206, %p207
      %p209 = scmp.ne.s32.totalorder %s198, %s201
      %p210 = scmp.eq.s32.totalorder %s25, 1
      %p211 = por %p209, %p210
      %p212 = scmp.ne.s32.totalorder %s201, %s202
      %p213 = scmp.eq.s32.totalorder %s25, 0
      %p214 = por %p212, %p213
      %p215 = scmp.ne.s32.totalorder %s201, %s202
      %p216 = scmp.eq.s32.totalorder %s26, 1
      %p217 = por %p215, %p216
      %p219 = scmp.ne.s32.totalorder %s202, %s218
      %p220 = scmp.eq.s32.totalorder %s26, 0
      %p221 = por %p219, %p220
      %s222 = ssub.s32 %s28, %s35
      %p223 = scmp.eq.s32.totalorder %s222, 0
      %s225 = sadd.s32 %s224, 1
      %s226 = scalar_select %p223, %s224, %s225
      %p229 = pneg %p223
      %p230 = scmp.eq.s32.totalorder %s20, 1
      %p231 = por %p229, %p230
      %p232 = scmp.ne.s32.totalorder %s224, %s227
      %p233 = scmp.eq.s32.totalorder %s20, 0
      %p234 = por %p232, %p233
      %p235 = scmp.ne.s32.totalorder %s224, %s227
      %p236 = scmp.eq.s32.totalorder %s25, 1
      %p237 = por %p235, %p236
      %p238 = scmp.ne.s32.totalorder %s227, %s228
      %p239 = scmp.eq.s32.totalorder %s25, 0
      %p240 = por %p238, %p239
      %p241 = scmp.ne.s32.totalorder %s227, %s228
      %p242 = scmp.eq.s32.totalorder %s26, 1
      %p243 = por %p241, %p242
      %p245 = scmp.ne.s32.totalorder %s228, %s244
      %p246 = scmp.eq.s32.totalorder %s26, 0
      %p247 = por %p245, %p246
      %s248 = ssub.s32 %s28, %s35
      %p249 = scmp.eq.s32.totalorder %s248, 0
      %s251 = sadd.s32 %s250, 1
      %s252 = scalar_select %p249, %s250, %s251
      %p255 = pneg %p249
      %p256 = scmp.eq.s32.totalorder %s20, 1
      %p257 = por %p255, %p256
      %p258 = scmp.ne.s32.totalorder %s250, %s253
      %p259 = scmp.eq.s32.totalorder %s20, 0
      %p260 = por %p258, %p259
      %p261 = scmp.ne.s32.totalorder %s250, %s253
      %p262 = scmp.eq.s32.totalorder %s25, 1
      %p263 = por %p261, %p262
      %p264 = scmp.ne.s32.totalorder %s253, %s254
      %p265 = scmp.eq.s32.totalorder %s25, 0
      %p266 = por %p264, %p265
      %p267 = scmp.ne.s32.totalorder %s253, %s254
      %p268 = scmp.eq.s32.totalorder %s26, 1
      %p269 = por %p267, %p268
      %p271 = scmp.ne.s32.totalorder %s254, %s270
      %p272 = scmp.eq.s32.totalorder %s26, 0
      %p273 = por %p271, %p272
      %s274 = ssub.s32 %s28, %s35
      %p275 = scmp.eq.s32.totalorder %s274, 0
      %s277 = sadd.s32 %s276, 1
      %s278 = scalar_select %p275, %s276, %s277
      %p281 = pneg %p275
      %p282 = scmp.eq.s32.totalorder %s20, 1
      %p283 = por %p281, %p282
      %p284 = scmp.ne.s32.totalorder %s276, %s279
      %p285 = scmp.eq.s32.totalorder %s20, 0
      %p286 = por %p284, %p285
      %p287 = scmp.ne.s32.totalorder %s276, %s279
      %p288 = scmp.eq.s32.totalorder %s25, 1
      %p289 = por %p287, %p288
      %p290 = scmp.ne.s32.totalorder %s279, %s280
      %p291 = scmp.eq.s32.totalorder %s25, 0
      %p292 = por %p290, %p291
      %p293 = scmp.ne.s32.totalorder %s279, %s280
      %p294 = scmp.eq.s32.totalorder %s26, 1
      %p295 = por %p293, %p294
      %p297 = scmp.ne.s32.totalorder %s280, %s296
      %p298 = scmp.eq.s32.totalorder %s26, 0
      %p299 = por %p297, %p298
      %s300 = ssub.s32 %s28, %s35
      %p301 = scmp.eq.s32.totalorder %s300, 0
      %s303 = sadd.s32 %s302, 1
      %s304 = scalar_select %p301, %s302, %s303
      %p307 = pneg %p301
      %p308 = scmp.eq.s32.totalorder %s20, 1
      %p309 = por %p307, %p308
      %p310 = scmp.ne.s32.totalorder %s302, %s305
      %p311 = scmp.eq.s32.totalorder %s20, 0
      %p312 = por %p310, %p311
      %p313 = scmp.ne.s32.totalorder %s302, %s305
      %p314 = scmp.eq.s32.totalorder %s25, 1
      %p315 = por %p313, %p314
      %p316 = scmp.ne.s32.totalorder %s305, %s306
      %p317 = scmp.eq.s32.totalorder %s25, 0
      %p318 = por %p316, %p317
      %p319 = scmp.ne.s32.totalorder %s305, %s306
      %p320 = scmp.eq.s32.totalorder %s26, 1
      %p321 = por %p319, %p320
      %p323 = scmp.ne.s32.totalorder %s306, %s322
      %p324 = scmp.eq.s32.totalorder %s26, 0
      %p325 = por %p323, %p324
      %s326 = ssub.s32 %s28, %s35
      %p327 = scmp.eq.s32.totalorder %s326, 0
      %s329 = sadd.s32 %s328, 1
      %s330 = scalar_select %p327, %s328, %s329
      %p333 = pneg %p327
      %p334 = scmp.eq.s32.totalorder %s20, 1
      %p335 = por %p333, %p334
      %p336 = scmp.ne.s32.totalorder %s328, %s331
      %p337 = scmp.eq.s32.totalorder %s20, 0
      %p338 = por %p336, %p337
      %p339 = scmp.ne.s32.totalorder %s328, %s331
      %p340 = scmp.eq.s32.totalorder %s25, 1
      %p341 = por %p339, %p340
      %p342 = scmp.ne.s32.totalorder %s331, %s332
      %p343 = scmp.eq.s32.totalorder %s25, 0
      %p344 = por %p342, %p343
      %p345 = scmp.ne.s32.totalorder %s331, %s332
      %p346 = scmp.eq.s32.totalorder %s26, 1
      %p347 = por %p345, %p346
      %p349 = scmp.ne.s32.totalorder %s332, %s348
      %p350 = scmp.eq.s32.totalorder %s26, 0
      %p351 = por %p349, %p350
      %s352 = ssub.s32 %s28, %s35
      %p353 = scmp.eq.s32.totalorder %s352, 0
      %s355 = sadd.s32 %s354, 1
      %s356 = scalar_select %p353, %s354, %s355
      %p359 = pneg %p353
      %p360 = scmp.eq.s32.totalorder %s20, 1
      %p361 = por %p359, %p360
      %p362 = scmp.ne.s32.totalorder %s354, %s357
      %p363 = scmp.eq.s32.totalorder %s20, 0
      %p364 = por %p362, %p363
      %p365 = scmp.ne.s32.totalorder %s354, %s357
      %p366 = scmp.eq.s32.totalorder %s25, 1
      %p367 = por %p365, %p366
      %p368 = scmp.ne.s32.totalorder %s357, %s358
      %p369 = scmp.eq.s32.totalorder %s25, 0
      %p370 = por %p368, %p369
      %p371 = scmp.ne.s32.totalorder %s357, %s358
      %p372 = scmp.eq.s32.totalorder %s26, 1
      %p373 = por %p371, %p372
      %p375 = scmp.ne.s32.totalorder %s358, %s374
      %p376 = scmp.eq.s32.totalorder %s26, 0
      %p377 = por %p375, %p376
      %s378 = ssub.s32 %s27, %s39
      %p379 = scmp.eq.s32.totalorder %s378, 0
      %s381 = sadd.s32 %s380, 1
      %s382 = scalar_select %p379, %s380, %s381
      %p385 = pneg %p379
      %p386 = scmp.eq.s32.totalorder %s20, 1
      %p387 = por %p385, %p386
      %p388 = scmp.ne.s32.totalorder %s380, %s383
      %p389 = scmp.eq.s32.totalorder %s20, 0
      %p390 = por %p388, %p389
      %p391 = scmp.ne.s32.totalorder %s380, %s383
      %p392 = scmp.eq.s32.totalorder %s25, 1
      %p393 = por %p391, %p392
      %p394 = scmp.ne.s32.totalorder %s383, %s384
      %p395 = scmp.eq.s32.totalorder %s25, 0
      %p396 = por %p394, %p395
      %p397 = scmp.ne.s32.totalorder %s383, %s384
      %p398 = scmp.eq.s32.totalorder %s26, 1
      %p399 = por %p397, %p398
      %p401 = scmp.ne.s32.totalorder %s384, %s400
      %p402 = scmp.eq.s32.totalorder %s26, 0
      %p403 = por %p401, %p402
      %p404 = scmp.le.s32.totalorder 1, %s20
      %p405 = scmp.lt.s32.totalorder %s20, 3
      %p406 = pnand %p404, %p405
      %p407 = pneg %p406
      // Predicated region
      $region9: #{tpu_custom_call.1} parent=5 // pred_check
        _
      $region10: #{tpu_custom_call.1} parent=5 // pred_check_branch
        %409 = sbr.rel (%p406) target = $region12
      $region11: #{tpu_custom_call.1} parent=5 // pred_region
        %s410 = ssub.s32 %s20, 1
        // Predicated region
        $region13: #{tpu_custom_call.1} parent=11 // pred_check
          %p411 = pneg %p58
        $region14: #{tpu_custom_call.1} parent=11 // pred_check_branch
          %413 = sbr.rel (%p411) target = $region16
        $region15: #{tpu_custom_call.1} parent=11 // pred_region
          %s414 = smul.u32 2, %s29
          %p415 = scmp.lt.s32.totalorder %s414, 1
          %s416 = scalar_select %p415, %s414, 1
          %s417 = smul.addr %s416, 8
          %s418 = scalar_lea.vmem %s0, %s417
          %s419 = smul.u32 2, %s29
        $region16: #{tpu_custom_call.1} parent=11 // pred_fallthru
          _
      $region12: #{tpu_custom_call.1} parent=5 // pred_fallthru
        _
      %p420 = scmp.lt.s32.totalorder %s20, 2
      // Predicated region
      $region17: #{tpu_custom_call.1} parent=5 // pred_check
        %p421 = pneg %p420
      $region18: #{tpu_custom_call.1} parent=5 // pred_check_branch
        %423 = sbr.rel (%p421) target = $region20
      $region19: #{tpu_custom_call.1} parent=5 // pred_region
        // Predicated region
        $region21: #{tpu_custom_call.1} parent=19 // pred_check
          %p424 = pneg %p78
        $region22: #{tpu_custom_call.1} parent=19 // pred_check_branch
          %426 = sbr.rel (%p424) target = $region24
        $region23: #{tpu_custom_call.1} parent=19 // pred_region
          %p427 = scmp.lt.s32.totalorder %s28, 1
          %s428 = scalar_select %p427, %s28, 1
          %s429 = scalar_lea.vmem %s1, %s428
        $region24: #{tpu_custom_call.1} parent=19 // pred_fallthru
          _
        // Predicated region
        $region25: #{tpu_custom_call.1} parent=19 // pred_check
          %p430 = pneg %p104
        $region26: #{tpu_custom_call.1} parent=19 // pred_check_branch
          %432 = sbr.rel (%p430) target = $region28
        $region27: #{tpu_custom_call.1} parent=19 // pred_region
          %p433 = scmp.lt.s32.totalorder %s28, 1
          %s434 = scalar_select %p433, %s28, 1
          %s435 = scalar_lea.vmem %s2, %s434
        $region28: #{tpu_custom_call.1} parent=19 // pred_fallthru
          _
        // Predicated region
        $region29: #{tpu_custom_call.1} parent=19 // pred_check
          %p436 = pneg %p130
        $region30: #{tpu_custom_call.1} parent=19 // pred_check_branch
          %438 = sbr.rel (%p436) target = $region32
        $region31: #{tpu_custom_call.1} parent=19 // pred_region
          %p439 = scmp.lt.s32.totalorder %s28, 1
          %s440 = scalar_select %p439, %s28, 1
          %s441 = smul.addr %s440, 4
          %s442 = smul.addr %s441, 4
          %s443 = scalar_lea.vmem %s3, %s442
        $region32: #{tpu_custom_call.1} parent=19 // pred_fallthru
          _
        // Predicated region
        $region33: #{tpu_custom_call.1} parent=19 // pred_check
          %p444 = pneg %p156
        $region34: #{tpu_custom_call.1} parent=19 // pred_check_branch
          %446 = sbr.rel (%p444) target = $region36
        $region35: #{tpu_custom_call.1} parent=19 // pred_region
          %p447 = scmp.lt.s32.totalorder %s28, 1
          %s448 = scalar_select %p447, %s28, 1
          %s449 = scalar_lea.vmem %s4, %s448
        $region36: #{tpu_custom_call.1} parent=19 // pred_fallthru
          _
        // Predicated region
        $region37: #{tpu_custom_call.1} parent=19 // pred_check
          %p450 = pneg %p182
        $region38: #{tpu_custom_call.1} parent=19 // pred_check_branch
          %452 = sbr.rel (%p450) target = $region40
        $region39: #{tpu_custom_call.1} parent=19 // pred_region
          %p453 = scmp.lt.s32.totalorder %s28, 1
          %s454 = scalar_select %p453, %s28, 1
          %s455 = smul.addr %s454, 4
          %s456 = smul.addr %s455, 4
          %s457 = scalar_lea.vmem %s5, %s456
        $region40: #{tpu_custom_call.1} parent=19 // pred_fallthru
          _
        // Predicated region
        $region41: #{tpu_custom_call.1} parent=19 // pred_check
          %p458 = pneg %p208
        $region42: #{tpu_custom_call.1} parent=19 // pred_check_branch
          %460 = sbr.rel (%p458) target = $region44
        $region43: #{tpu_custom_call.1} parent=19 // pred_region
          %p461 = scmp.lt.s32.totalorder %s28, 1
          %s462 = scalar_select %p461, %s28, 1
          %s463 = scalar_lea.vmem %s6, %s462
        $region44: #{tpu_custom_call.1} parent=19 // pred_fallthru
          _
        // Predicated region
        $region45: #{tpu_custom_call.1} parent=19 // pred_check
          %p464 = pneg %p234
        $region46: #{tpu_custom_call.1} parent=19 // pred_check_branch
          %466 = sbr.rel (%p464) target = $region48
        $region47: #{tpu_custom_call.1} parent=19 // pred_region
          %p467 = scmp.lt.s32.totalorder %s28, 1
          %s468 = scalar_select %p467, %s28, 1
          %s469 = scalar_lea.vmem %s7, %s468
        $region48: #{tpu_custom_call.1} parent=19 // pred_fallthru
          _
        // Predicated region
        $region49: #{tpu_custom_call.1} parent=19 // pred_check
          %p470 = pneg %p260
        $region50: #{tpu_custom_call.1} parent=19 // pred_check_branch
          %472 = sbr.rel (%p470) target = $region52
        $region51: #{tpu_custom_call.1} parent=19 // pred_region
          %p473 = scmp.lt.s32.totalorder %s28, 1
          %s474 = scalar_select %p473, %s28, 1
          %s475 = scalar_lea.vmem %s8, %s474
        $region52: #{tpu_custom_call.1} parent=19 // pred_fallthru
          _
        // Predicated region
        $region53: #{tpu_custom_call.1} parent=19 // pred_check
          %p476 = pneg %p286
        $region54: #{tpu_custom_call.1} parent=19 // pred_check_branch
          %478 = sbr.rel (%p476) target = $region56
        $region55: #{tpu_custom_call.1} parent=19 // pred_region
          %p479 = scmp.lt.s32.totalorder %s28, 1
          %s480 = scalar_select %p479, %s28, 1
          %s481 = smul.addr %s480, 4
          %s482 = smul.addr %s481, 4
          %s483 = scalar_lea.vmem %s9, %s482
        $region56: #{tpu_custom_call.1} parent=19 // pred_fallthru
          _
        // Predicated region
        $region57: #{tpu_custom_call.1} parent=19 // pred_check
          %p484 = pneg %p312
        $region58: #{tpu_custom_call.1} parent=19 // pred_check_branch
          %486 = sbr.rel (%p484) target = $region60
        $region59: #{tpu_custom_call.1} parent=19 // pred_region
          %p487 = scmp.lt.s32.totalorder %s28, 1
          %s488 = scalar_select %p487, %s28, 1
          %s489 = scalar_lea.vmem %s10, %s488
        $region60: #{tpu_custom_call.1} parent=19 // pred_fallthru
          _
        // Predicated region
        $region61: #{tpu_custom_call.1} parent=19 // pred_check
          %p490 = pneg %p338
        $region62: #{tpu_custom_call.1} parent=19 // pred_check_branch
          %492 = sbr.rel (%p490) target = $region64
        $region63: #{tpu_custom_call.1} parent=19 // pred_region
          %p493 = scmp.lt.s32.totalorder %s28, 1
          %s494 = scalar_select %p493, %s28, 1
          %s495 = smul.addr %s494, 16
          %s496 = smul.addr %s495, 4
          %s497 = scalar_lea.vmem %s11, %s496
        $region64: #{tpu_custom_call.1} parent=19 // pred_fallthru
          _
        // Predicated region
        $region65: #{tpu_custom_call.1} parent=19 // pred_check
          %p498 = pneg %p364
        $region66: #{tpu_custom_call.1} parent=19 // pred_check_branch
          %500 = sbr.rel (%p498) target = $region68
        $region67: #{tpu_custom_call.1} parent=19 // pred_region
          %p501 = scmp.lt.s32.totalorder %s28, 1
          %s502 = scalar_select %p501, %s28, 1
          %s503 = scalar_lea.vmem %s12, %s502
        $region68: #{tpu_custom_call.1} parent=19 // pred_fallthru
          _
      $region20: #{tpu_custom_call.1} parent=5 // pred_fallthru
        _
      %p504 = scmp.le.s32.totalorder 1, %s20
      %p505 = scmp.lt.s32.totalorder %s20, 3
      %p506 = pnand %p504, %p505
      %p507 = pneg %p506
      // Predicated region
      $region69: #{tpu_custom_call.1} parent=5 // pred_check
        _
      $region70: #{tpu_custom_call.1} parent=5 // pred_check_branch
        %509 = sbr.rel (%p506) target = $region72
      $region71: #{tpu_custom_call.1} parent=5 // pred_region
        %s510 = ssub.s32 %s20, 1
        %s511 = smul.u32 2, %s29
        %p512 = scmp.lt.s32.totalorder %s511, 1
        %s513 = scalar_select %p512, %s511, 1
        %s514 = smul.addr %s513, 8
        %s515 = scalar_lea.vmem %s0, %s514
        %p516 = pneg %p58
        %p517 = pneg %p55
        %p518 = scmp.lt.s32.totalorder %s30, 1
        %s519 = scalar_select %p518, %s30, 1
        %s520 = scalar_lea.vmem %s1, %s519
        %p521 = pneg %p84
        %p522 = pneg %p81
        %p523 = scmp.lt.s32.totalorder %s30, 1
        %s524 = scalar_select %p523, %s30, 1
        %s525 = scalar_lea.vmem %s2, %s524
        %p526 = pneg %p110
        %p527 = pneg %p107
        %p528 = scmp.lt.s32.totalorder %s30, 1
        %s529 = scalar_select %p528, %s30, 1
        %s530 = smul.addr %s529, 4
        %s531 = smul.addr %s530, 4
        %s532 = scalar_lea.vmem %s3, %s531
        %p533 = pneg %p136
        %p534 = pneg %p133
        %p535 = scmp.lt.s32.totalorder %s30, 1
        %s536 = scalar_select %p535, %s30, 1
        %s537 = scalar_lea.vmem %s4, %s536
        %p538 = pneg %p162
        %p539 = pneg %p159
        %p540 = scmp.lt.s32.totalorder %s30, 1
        %s541 = scalar_select %p540, %s30, 1
        %s542 = smul.addr %s541, 4
        %s543 = smul.addr %s542, 4
        %s544 = scalar_lea.vmem %s5, %s543
        %p545 = pneg %p188
        %p546 = pneg %p185
        %p547 = scmp.lt.s32.totalorder %s30, 1
        %s548 = scalar_select %p547, %s30, 1
        %s549 = scalar_lea.vmem %s6, %s548
        %p550 = pneg %p214
        %p551 = pneg %p211
        %p552 = scmp.lt.s32.totalorder %s30, 1
        %s553 = scalar_select %p552, %s30, 1
        %s554 = scalar_lea.vmem %s7, %s553
        %p555 = pneg %p240
        %p556 = pneg %p237
        %p557 = scmp.lt.s32.totalorder %s30, 1
        %s558 = scalar_select %p557, %s30, 1
        %s559 = scalar_lea.vmem %s8, %s558
        %p560 = pneg %p266
        %p561 = pneg %p263
        %p562 = scmp.lt.s32.totalorder %s30, 1
        %s563 = scalar_select %p562, %s30, 1
        %s564 = smul.addr %s563, 4
        %s565 = smul.addr %s564, 4
        %s566 = scalar_lea.vmem %s9, %s565
        %p567 = pneg %p292
        %p568 = pneg %p289
        %p569 = scmp.lt.s32.totalorder %s30, 1
        %s570 = scalar_select %p569, %s30, 1
        %s571 = scalar_lea.vmem %s10, %s570
        %p572 = pneg %p318
        %p573 = pneg %p315
        %p574 = scmp.lt.s32.totalorder %s30, 1
        %s575 = scalar_select %p574, %s30, 1
        %s576 = smul.addr %s575, 16
        %s577 = smul.addr %s576, 4
        %s578 = scalar_lea.vmem %s11, %s577
        %p579 = pneg %p344
        %p580 = pneg %p341
        %p581 = scmp.lt.s32.totalorder %s30, 1
        %s582 = scalar_select %p581, %s30, 1
        %s583 = scalar_lea.vmem %s12, %s582
        %p584 = pneg %p370
        %p585 = pneg %p367
        %p586 = pneg %p396
        %p587 = pneg %p393
        %s588 = smul.u32 2, %s29
        %p589 = scmp.lt.s32.totalorder %s588, 1
        %s590 = scalar_select %p589, %s588, 1
        %s591 = smul.addr %s590, 8
        %s592 = scalar_lea.vmem %s0, %s591
        %s593 = smul.u32 2, %s29
        %p594 = scmp.lt.s32.totalorder %s30, 1
        %s595 = scalar_select %p594, %s30, 1
        %s596 = scalar_lea.vmem %s1, %s595
        %p597 = scmp.lt.s32.totalorder %s30, 1
        %s598 = scalar_select %p597, %s30, 1
        %s599 = scalar_lea.vmem %s2, %s598
        %p600 = scmp.lt.s32.totalorder %s30, 1
        %s601 = scalar_select %p600, %s30, 1
        %s602 = smul.addr %s601, 4
        %s603 = smul.addr %s602, 4
        %s604 = scalar_lea.vmem %s3, %s603
        %p605 = scmp.lt.s32.totalorder %s30, 1
        %s606 = scalar_select %p605, %s30, 1
        %s607 = scalar_lea.vmem %s4, %s606
        %p608 = scmp.lt.s32.totalorder %s30, 1
        %s609 = scalar_select %p608, %s30, 1
        %s610 = smul.addr %s609, 4
        %s611 = smul.addr %s610, 4
        %s612 = scalar_lea.vmem %s5, %s611
        %p613 = scmp.lt.s32.totalorder %s30, 1
        %s614 = scalar_select %p613, %s30, 1
        %s615 = scalar_lea.vmem %s6, %s614
        %p616 = scmp.lt.s32.totalorder %s30, 1
        %s617 = scalar_select %p616, %s30, 1
        %s618 = scalar_lea.vmem %s7, %s617
        %p619 = scmp.lt.s32.totalorder %s30, 1
        %s620 = scalar_select %p619, %s30, 1
        %s621 = scalar_lea.vmem %s8, %s620
        %p622 = scmp.lt.s32.totalorder %s30, 1
        %s623 = scalar_select %p622, %s30, 1
        %s624 = smul.addr %s623, 4
        %s625 = smul.addr %s624, 4
        %s626 = scalar_lea.vmem %s9, %s625
        %p627 = scmp.lt.s32.totalorder %s30, 1
        %s628 = scalar_select %p627, %s30, 1
        %s629 = scalar_lea.vmem %s10, %s628
        %p630 = scmp.lt.s32.totalorder %s30, 1
        %s631 = scalar_select %p630, %s30, 1
        %s632 = smul.addr %s631, 16
        %s633 = smul.addr %s632, 4
        %s634 = scalar_lea.vmem %s11, %s633
        %p635 = scmp.lt.s32.totalorder %s30, 1
        %s636 = scalar_select %p635, %s30, 1
        %s637 = scalar_lea.vmem %s12, %s636
        %s638 = smul.u32 2, %s29
        %p640 = scmp.eq.s32.totalorder %s30, 0
        // Predicated region
        $region73: #{tpu_custom_call.1} parent=71 // pred_check
          %p641 = pneg %p640
        $region74: #{tpu_custom_call.1} parent=71 // pred_check_branch
          %643 = sbr.rel (%p641) target = $region76
        $region75: #{tpu_custom_call.1} parent=71 // pred_region
          %v644 = vld [vmem:[%s592] sm:$0xff]
          %v645 = vld [vmem:[%s592 + $0x8] sm:$0xff]
          %vm646 = vcmask 261120
          %647 = vst.msk [vmem:[#allocation2] sm:$0xff] %vm646, %v644
          %648 = vst.msk [vmem:[#allocation2 + $0x8] sm:$0xff] %vm646, %v645
        $region76: #{tpu_custom_call.1} parent=71 // pred_fallthru
          _
        %v649 = vld [vmem:[#allocation2] sm:$0xff]
        %v650 = vld [vmem:[#allocation2 + $0x8] sm:$0xff]
        %v651 = vld [vmem:[%s596] sm:$0x1]
        %v652 = vld [vmem:[%s599] sm:$0x1]
        %vm653 = vcmask 261120
        %v654 = vsel %vm653, %v649, 0.0
        %655 = vadd.xlane.f32.xlu0 %v654
        %v656 = vpop.xlane.xlu0 %655
        %v657 = vsel %vm653, %v650, 0.0
        %658 = vadd.xlane.f32.xlu0 %v657
        %v659 = vpop.xlane.xlu0 %658
        %v660 = vrcp.pop 32.0
        %v661 = vmul.f32 32.0, %v660
        %v662 = vsub.f32 1.0, %v661
        %v663 = vmul.f32 %v660, %v662
        %v664 = vadd.f32 %v660, %v663
        %vm665 = vweird.f32 %v660
        %v666 = vsel %vm665, %v660, %v664
        %v667 = vmul.f32 %v656, %v666
        %v668 = vmul.f32 %v659, %v666
        %v669 = vsub.f32 %v649, %v667
        %v670 = vsub.f32 %v650, %v668
        %v671 = vmul.f32 %v669, %v669
        %v672 = vmul.f32 %v670, %v670
        %v673 = vsel %vm653, %v671, 0.0
        %674 = vadd.xlane.f32.xlu0 %v673
        %v675 = vpop.xlane.xlu0 %674
        %v676 = vsel %vm653, %v672, 0.0
        %677 = vadd.xlane.f32.xlu0 %v676
        %v678 = vpop.xlane.xlu0 %677
        %v679 = vmul.f32 %v675, %v666
        %v680 = vmul.f32 %v678, %v666
        %v681 = vadd.f32 %v679, 1e-05
        %v682 = vadd.f32 %v680, 1e-05
        %v683 = vrsqrt.pop %v681
        %v684 = vmul.f32 %v683, %v681
        %v685 = vmul.f32 %v684, %v683
        %v686 = vmul.f32 0.5, %v685
        %v687 = vsub.f32 1.5, %v686
        %v688 = vmul.f32 %v683, %v687
        %vm689 = vweird.f32 %v681
        %vm690 = vweird.f32 %v683
        %vm691 = vmor %vm689, %vm690
        %v692 = vsel %vm691, %v683, %v688
        %v693 = vrsqrt.pop %v682
        %v694 = vmul.f32 %v693, %v682
        %v695 = vmul.f32 %v694, %v693
        %v696 = vmul.f32 0.5, %v695
        %v697 = vsub.f32 1.5, %v696
        %v698 = vmul.f32 %v693, %v697
        %vm699 = vweird.f32 %v682
        %vm700 = vweird.f32 %v693
        %vm701 = vmor %vm699, %vm700
        %v702 = vsel %vm701, %v693, %v698
        %v703 = vmul.f32 %v669, %v692
        %v704 = vmul.f32 %v670, %v702
        %v706 = vperm.slane %v651, 0
        %v708 = vmul.f32 %v703, %v706
        %v709 = vmul.f32 %v704, %v706
        %v711 = vperm.slane %v652, 0
        %v713 = vadd.f32 %v708, %v711
        %v714 = vadd.f32 %v709, %v711
        %v715 = vpack.c.bf16 %v714, %v713
        %v716 = vld [vmem:[%s604] sm:$0xf]
        %v717 = vld [vmem:[%s604 + $0x4] sm:$0xf]
        %v718 = vld [vmem:[%s604 + $0x8] sm:$0xf]
        %v719 = vld [vmem:[%s604 + $0xc] sm:$0xf]
        %v720 = vld [vmem:[%s607] sm:$0x1]
        %v722 = vperm.slane %v720, 0
        %v728 = vunpack.c.l.b16 %v716
        %v729 = vunpack.c.l.b16 %v717
        %v730 = vunpack.c.l.b16 %v718
        %v731 = vunpack.c.l.b16 %v719
        %v732 = vpack.c.b16 %v729, %v728
        %v733 = vpack.c.b16 %v731, %v730
        %v737 = vsel %vm653, %v715, 0
        %739 = vmatpush.bf16.msra.mxu0 0
        %740 = vmatpush.bf16.msra.mxu0 0
        %741 = vmatpush.bf16.msra.mxu0 0
        %742 = vmatpush.bf16.msra.mxu0 0
        %743 = vmatpush.bf16.msra.mxu0 0
        %744 = vmatpush.bf16.msra.mxu0 0
        %745 = vmatpush.bf16.msra.mxu0 %v733
        %746 = vmatpush.bf16.msra.mxu0 %v732
        %747 = vmatmul.bf16.gmra.mxu0 %v737
        %v748 = vpop.f32.mrf.mxu0
        %v749 = vadd.f32 %v722, %v748
        %v750 = vpop.f32.mrf.mxu0
        %v751 = vadd.f32 %v722, %v750
        %752 = vdwg.mxu0
        %v753 = vlaneseq
        %v754 = vshrl.u32 %v753, 7
        %v755 = vlaneseq
        %v756 = vand.u32 %v755, 127
        %vm757 = vcmp.gt.s32.totalorder %v756, %v754
        %v758 = vsel %vm757, -1e+09, 0.0
        %v759 = vmul.f32 %v749, 0.35355338
        %v760 = vmul.f32 %v751, 0.35355338
        %v761 = vpack.c.bf16 %v759, %v759
        %v762 = vpack.c.bf16 %v760, %v760
        %v763 = vpack.c.bf16 %v749, %v749
        %v764 = vpack.c.bf16 %v751, %v751
        %v766 = vunpack.c.l.b16 %v763
        %v767 = vpack.c.b16 %v766, %v766
        %768 = vrot.lane.b32.xlu0 %v767, 96
        %v769 = vpop.permute.xlu0 %768
        %vm770 = vcmask 64512
        %v772 = vsel %vm770, %v761, 0
        %v775 = vsel %vm770, %v769, 0
        %777 = vmatpush.bf16.xpose.msra.mxu0 0
        %778 = vmatpush.bf16.xpose.msra.mxu0 0
        %779 = vmatpush.bf16.xpose.msra.mxu0 0
        %780 = vmatpush.bf16.xpose.msra.mxu0 0
        %781 = vmatpush.bf16.xpose.msra.mxu0 0
        %782 = vmatpush.bf16.xpose.msra.mxu0 0
        %783 = vmatpush.bf16.xpose.msra.mxu0 0
        %784 = vmatpush.bf16.xpose.msra.mxu0 %v775
        %785 = vmatmul.bf16.gmra.mxu0 %v772
        %v786 = vpop.f32.mrf.mxu0
        %v787 = vadd.f32 %v758, %v786
        %v788 = vpop.f32.mrf.mxu0
        %789 = vdwg.mxu0
        %v791 = vunpack.c.l.b16 %v764
        %v792 = vpack.c.b16 %v791, %v791
        %793 = vrot.lane.b32.xlu0 %v792, 96
        %v794 = vpop.permute.xlu0 %793
        %v796 = vsel %vm770, %v762, 0
        %v799 = vsel %vm770, %v794, 0
        %801 = vmatpush.bf16.xpose.msra.mxu0 0
        %802 = vmatpush.bf16.xpose.msra.mxu0 0
        %803 = vmatpush.bf16.xpose.msra.mxu0 0
        %804 = vmatpush.bf16.xpose.msra.mxu0 0
        %805 = vmatpush.bf16.xpose.msra.mxu0 0
        %806 = vmatpush.bf16.xpose.msra.mxu0 0
        %807 = vmatpush.bf16.xpose.msra.mxu0 0
        %808 = vmatpush.bf16.xpose.msra.mxu0 %v799
        %809 = vmatmul.bf16.gmra.mxu0 %v796
        %v810 = vpop.f32.mrf.mxu0
        %v811 = vadd.f32 %v758, %v810
        %v812 = vpop.f32.mrf.mxu0
        %813 = vdwg.mxu0
        %v814 = vsel %vm770, %v787, -inf
        %815 = vmax.xlane.f32.xlu0 %v814
        %v816 = vpop.xlane.xlu0 %815
        %v817 = vsel %vm770, %v811, -inf
        %818 = vmax.xlane.f32.xlu0 %v817
        %v819 = vpop.xlane.xlu0 %818
        %v820 = vsub.f32 %v787, %v816
        %v821 = vsub.f32 %v811, %v819
        %v822 = vmul.f32 %v820, 1.442695
        %v823 = vpow.pop %v822
        %v824 = vmul.f32 %v821, 1.442695
        %v825 = vpow.pop %v824
        %v826 = vsel %vm770, %v823, 0.0
        %827 = vadd.xlane.f32.xlu0 %v826
        %v828 = vpop.xlane.xlu0 %827
        %v829 = vsel %vm770, %v825, 0.0
        %830 = vadd.xlane.f32.xlu0 %v829
        %v831 = vpop.xlane.xlu0 %830
        %v832 = vrcp.pop %v828
        %v833 = vrcp.pop %v831
        %v834 = vmul.f32 %v823, %v832
        %v835 = vmul.f32 %v825, %v833
        %v836 = vpack.c.bf16 %v834, %v834
        %v837 = vpack.c.bf16 %v835, %v835
        %838 = vrot.lane.b32.xlu0 %v767, 64
        %v839 = vpop.permute.xlu0 %838
        %v841 = vsel %vm770, %v836, 0
        %vm843 = vcmask 1043456
        %v845 = vsel %vm843, %v839, 0
        %847 = vmatpush.bf16.msra.mxu0 0
        %848 = vmatpush.bf16.msra.mxu0 0
        %849 = vmatpush.bf16.msra.mxu0 0
        %850 = vmatpush.bf16.msra.mxu0 0
        %851 = vmatpush.bf16.msra.mxu0 0
        %852 = vmatpush.bf16.msra.mxu0 0
        %853 = vmatpush.bf16.msra.mxu0 0
        %854 = vmatpush.bf16.msra.mxu0 %v845
        %855 = vmatmul.bf16.gmra.mxu0 %v841
        %v856 = vpop.f32.mrf.mxu0
        %v857 = vadd.f32 0.0, %v856
        %v858 = vpop.f32.mrf.mxu0
        %859 = vdwg.mxu0
        %860 = vrot.lane.b32.xlu0 %v792, 64
        %v861 = vpop.permute.xlu0 %860
        %v863 = vsel %vm770, %v837, 0
        %v866 = vsel %vm843, %v861, 0
        %868 = vmatpush.bf16.msra.mxu0 0
        %869 = vmatpush.bf16.msra.mxu0 0
        %870 = vmatpush.bf16.msra.mxu0 0
        %871 = vmatpush.bf16.msra.mxu0 0
        %872 = vmatpush.bf16.msra.mxu0 0
        %873 = vmatpush.bf16.msra.mxu0 0
        %874 = vmatpush.bf16.msra.mxu0 0
        %875 = vmatpush.bf16.msra.mxu0 %v866
        %876 = vmatmul.bf16.gmra.mxu0 %v863
        %v877 = vpop.f32.mrf.mxu0
        %v878 = vadd.f32 0.0, %v877
        %v879 = vpop.f32.mrf.mxu0
        %880 = vdwg.mxu0
        %881 = vst.msk [vmem:[#allocation3] sm:$0xff] %vm770, %v857
        %882 = vst.msk [vmem:[#allocation3 + $0x8] sm:$0xff] %vm770, %v878
        %v884 = vunpack.c.l.b16 %v761
        %v885 = vpack.c.b16 %v884, %v884
        %886 = vrot.lane.b32.xlu0 %v885, 120
        %v887 = vpop.permute.xlu0 %886
        %888 = vrot.lane.b32.xlu0 %v767, 88
        %v889 = vpop.permute.xlu0 %888
        %v891 = vsel %vm770, %v887, 0
        %v894 = vsel %vm770, %v889, 0
        %896 = vmatpush.bf16.xpose.msra.mxu0 0
        %897 = vmatpush.bf16.xpose.msra.mxu0 0
        %898 = vmatpush.bf16.xpose.msra.mxu0 0
        %899 = vmatpush.bf16.xpose.msra.mxu0 0
        %900 = vmatpush.bf16.xpose.msra.mxu0 0
        %901 = vmatpush.bf16.xpose.msra.mxu0 0
        %902 = vmatpush.bf16.xpose.msra.mxu0 0
        %903 = vmatpush.bf16.xpose.msra.mxu0 %v894
        %904 = vmatmul.bf16.gmra.mxu0 %v891
        %v905 = vpop.f32.mrf.mxu0
        %v906 = vadd.f32 %v758, %v905
        %v907 = vpop.f32.mrf.mxu0
        %908 = vdwg.mxu0
        %v910 = vunpack.c.l.b16 %v762
        %v911 = vpack.c.b16 %v910, %v910
        %912 = vrot.lane.b32.xlu0 %v911, 120
        %v913 = vpop.permute.xlu0 %912
        %914 = vrot.lane.b32.xlu0 %v792, 88
        %v915 = vpop.permute.xlu0 %914
        %v917 = vsel %vm770, %v913, 0
        %v920 = vsel %vm770, %v915, 0
        %922 = vmatpush.bf16.xpose.msra.mxu0 0
        %923 = vmatpush.bf16.xpose.msra.mxu0 0
        %924 = vmatpush.bf16.xpose.msra.mxu0 0
        %925 = vmatpush.bf16.xpose.msra.mxu0 0
        %926 = vmatpush.bf16.xpose.msra.mxu0 0
        %927 = vmatpush.bf16.xpose.msra.mxu0 0
        %928 = vmatpush.bf16.xpose.msra.mxu0 0
        %929 = vmatpush.bf16.xpose.msra.mxu0 %v920
        %930 = vmatmul.bf16.gmra.mxu0 %v917
        %v931 = vpop.f32.mrf.mxu0
        %v932 = vadd.f32 %v758, %v931
        %v933 = vpop.f32.mrf.mxu0
        %934 = vdwg.mxu0
        %v935 = vsel %vm770, %v906, -inf
        %936 = vmax.xlane.f32.xlu0 %v935
        %v937 = vpop.xlane.xlu0 %936
        %v938 = vsel %vm770, %v932, -inf
        %939 = vmax.xlane.f32.xlu0 %v938
        %v940 = vpop.xlane.xlu0 %939
        %v941 = vsub.f32 %v906, %v937
        %v942 = vsub.f32 %v932, %v940
        %v943 = vmul.f32 %v941, 1.442695
        %v944 = vpow.pop %v943
        %v945 = vmul.f32 %v942, 1.442695
        %v946 = vpow.pop %v945
        %v947 = vsel %vm770, %v944, 0.0
        %948 = vadd.xlane.f32.xlu0 %v947
        %v949 = vpop.xlane.xlu0 %948
        %v950 = vsel %vm770, %v946, 0.0
        %951 = vadd.xlane.f32.xlu0 %v950
        %v952 = vpop.xlane.xlu0 %951
        %v953 = vrcp.pop %v949
        %v954 = vrcp.pop %v952
        %v955 = vmul.f32 %v944, %v953
        %v956 = vmul.f32 %v946, %v954
        %v957 = vpack.c.bf16 %v955, %v955
        %v958 = vpack.c.bf16 %v956, %v956
        %959 = vrot.lane.b32.xlu0 %v767, 56
        %v960 = vpop.permute.xlu0 %959
        %v962 = vsel %vm770, %v957, 0
        %v965 = vsel %vm843, %v960, 0
        %967 = vmatpush.bf16.msra.mxu0 0
        %968 = vmatpush.bf16.msra.mxu0 0
        %969 = vmatpush.bf16.msra.mxu0 0
        %970 = vmatpush.bf16.msra.mxu0 0
        %971 = vmatpush.bf16.msra.mxu0 0
        %972 = vmatpush.bf16.msra.mxu0 0
        %973 = vmatpush.bf16.msra.mxu0 0
        %974 = vmatpush.bf16.msra.mxu0 %v965
        %975 = vmatmul.bf16.gmra.mxu0 %v962
        %v976 = vpop.f32.mrf.mxu0
        %v977 = vadd.f32 0.0, %v976
        %v978 = vpop.f32.mrf.mxu0
        %979 = vdwg.mxu0
        %980 = vrot.lane.b32.xlu0 %v792, 56
        %v981 = vpop.permute.xlu0 %980
        %v983 = vsel %vm770, %v958, 0
        %v986 = vsel %vm843, %v981, 0
        %988 = vmatpush.bf16.msra.mxu0 0
        %989 = vmatpush.bf16.msra.mxu0 0
        %990 = vmatpush.bf16.msra.mxu0 0
        %991 = vmatpush.bf16.msra.mxu0 0
        %992 = vmatpush.bf16.msra.mxu0 0
        %993 = vmatpush.bf16.msra.mxu0 0
        %994 = vmatpush.bf16.msra.mxu0 0
        %995 = vmatpush.bf16.msra.mxu0 %v986
        %996 = vmatmul.bf16.gmra.mxu0 %v983
        %v997 = vpop.f32.mrf.mxu0
        %v998 = vadd.f32 0.0, %v997
        %v999 = vpop.f32.mrf.mxu0
        %1000 = vdwg.mxu0
        %1003 = vrot.lane.b32.xlu0 %v977, 8
        %v1004 = vpop.permute.xlu0 %1003
        %1005 = vrot.lane.b32.xlu0 %v998, 8
        %v1006 = vpop.permute.xlu0 %1005
        %vm1009 = vcmask 130112
        %1010 = vst.msk [vmem:[#allocation3] sm:$0xff] %vm1009, %v1004
        %1011 = vst.msk [vmem:[#allocation3 + $0x8] sm:$0xff] %vm1009, %v1006
        %1012 = vrot.lane.b32.xlu0 %v885, 112
        %v1013 = vpop.permute.xlu0 %1012
        %1014 = vrot.lane.b32.xlu0 %v767, 80
        %v1015 = vpop.permute.xlu0 %1014
        %v1017 = vsel %vm770, %v1013, 0
        %v1020 = vsel %vm770, %v1015, 0
        %1022 = vmatpush.bf16.xpose.msra.mxu0 0
        %1023 = vmatpush.bf16.xpose.msra.mxu0 0
        %1024 = vmatpush.bf16.xpose.msra.mxu0 0
        %1025 = vmatpush.bf16.xpose.msra.mxu0 0
        %1026 = vmatpush.bf16.xpose.msra.mxu0 0
        %1027 = vmatpush.bf16.xpose.msra.mxu0 0
        %1028 = vmatpush.bf16.xpose.msra.mxu0 0
        %1029 = vmatpush.bf16.xpose.msra.mxu0 %v1020
        %1030 = vmatmul.bf16.gmra.mxu0 %v1017
        %v1031 = vpop.f32.mrf.mxu0
        %v1032 = vadd.f32 %v758, %v1031
        %v1033 = vpop.f32.mrf.mxu0
        %1034 = vdwg.mxu0
        %1035 = vrot.lane.b32.xlu0 %v911, 112
        %v1036 = vpop.permute.xlu0 %1035
        %1037 = vrot.lane.b32.xlu0 %v792, 80
        %v1038 = vpop.permute.xlu0 %1037
        %v1040 = vsel %vm770, %v1036, 0
        %v1043 = vsel %vm770, %v1038, 0
        %1045 = vmatpush.bf16.xpose.msra.mxu0 0
        %1046 = vmatpush.bf16.xpose.msra.mxu0 0
        %1047 = vmatpush.bf16.xpose.msra.mxu0 0
        %1048 = vmatpush.bf16.xpose.msra.mxu0 0
        %1049 = vmatpush.bf16.xpose.msra.mxu0 0
        %1050 = vmatpush.bf16.xpose.msra.mxu0 0
        %1051 = vmatpush.bf16.xpose.msra.mxu0 0
        %1052 = vmatpush.bf16.xpose.msra.mxu0 %v1043
        %1053 = vmatmul.bf16.gmra.mxu0 %v1040
        %v1054 = vpop.f32.mrf.mxu0
        %v1055 = vadd.f32 %v758, %v1054
        %v1056 = vpop.f32.mrf.mxu0
        %1057 = vdwg.mxu0
        %v1058 = vsel %vm770, %v1032, -inf
        %1059 = vmax.xlane.f32.xlu0 %v1058
        %v1060 = vpop.xlane.xlu0 %1059
        %v1061 = vsel %vm770, %v1055, -inf
        %1062 = vmax.xlane.f32.xlu0 %v1061
        %v1063 = vpop.xlane.xlu0 %1062
        %v1064 = vsub.f32 %v1032, %v1060
        %v1065 = vsub.f32 %v1055, %v1063
        %v1066 = vmul.f32 %v1064, 1.442695
        %v1067 = vpow.pop %v1066
        %v1068 = vmul.f32 %v1065, 1.442695
        %v1069 = vpow.pop %v1068
        %v1070 = vsel %vm770, %v1067, 0.0
        %1071 = vadd.xlane.f32.xlu0 %v1070
        %v1072 = vpop.xlane.xlu0 %1071
        %v1073 = vsel %vm770, %v1069, 0.0
        %1074 = vadd.xlane.f32.xlu0 %v1073
        %v1075 = vpop.xlane.xlu0 %1074
        %v1076 = vrcp.pop %v1072
        %v1077 = vrcp.pop %v1075
        %v1078 = vmul.f32 %v1067, %v1076
        %v1079 = vmul.f32 %v1069, %v1077
        %v1080 = vpack.c.bf16 %v1078, %v1078
        %v1081 = vpack.c.bf16 %v1079, %v1079
        %1082 = vrot.lane.b32.xlu0 %v767, 48
        %v1083 = vpop.permute.xlu0 %1082
        %v1085 = vsel %vm770, %v1080, 0
        %v1088 = vsel %vm843, %v1083, 0
        %1090 = vmatpush.bf16.msra.mxu0 0
        %1091 = vmatpush.bf16.msra.mxu0 0
        %1092 = vmatpush.bf16.msra.mxu0 0
        %1093 = vmatpush.bf16.msra.mxu0 0
        %1094 = vmatpush.bf16.msra.mxu0 0
        %1095 = vmatpush.bf16.msra.mxu0 0
        %1096 = vmatpush.bf16.msra.mxu0 0
        %1097 = vmatpush.bf16.msra.mxu0 %v1088
        %1098 = vmatmul.bf16.gmra.mxu0 %v1085
        %v1099 = vpop.f32.mrf.mxu0
        %v1100 = vadd.f32 0.0, %v1099
        %v1101 = vpop.f32.mrf.mxu0
        %1102 = vdwg.mxu0
        %1103 = vrot.lane.b32.xlu0 %v792, 48
        %v1104 = vpop.permute.xlu0 %1103
        %v1106 = vsel %vm770, %v1081, 0
        %v1109 = vsel %vm843, %v1104, 0
        %1111 = vmatpush.bf16.msra.mxu0 0
        %1112 = vmatpush.bf16.msra.mxu0 0
        %1113 = vmatpush.bf16.msra.mxu0 0
        %1114 = vmatpush.bf16.msra.mxu0 0
        %1115 = vmatpush.bf16.msra.mxu0 0
        %1116 = vmatpush.bf16.msra.mxu0 0
        %1117 = vmatpush.bf16.msra.mxu0 0
        %1118 = vmatpush.bf16.msra.mxu0 %v1109
        %1119 = vmatmul.bf16.gmra.mxu0 %v1106
        %v1120 = vpop.f32.mrf.mxu0
        %v1121 = vadd.f32 0.0, %v1120
        %v1122 = vpop.f32.mrf.mxu0
        %1123 = vdwg.mxu0
        %1126 = vrot.lane.b32.xlu0 %v1100, 16
        %v1127 = vpop.permute.xlu0 %1126
        %1128 = vrot.lane.b32.xlu0 %v1121, 16
        %v1129 = vpop.permute.xlu0 %1128
        %vm1132 = vcmask 195712
        %1133 = vst.msk [vmem:[#allocation3] sm:$0xff] %vm1132, %v1127
        %1134 = vst.msk [vmem:[#allocation3 + $0x8] sm:$0xff] %vm1132, %v1129
        %1135 = vrot.lane.b32.xlu0 %v885, 104
        %v1136 = vpop.permute.xlu0 %1135
        %1137 = vrot.lane.b32.xlu0 %v767, 72
        %v1138 = vpop.permute.xlu0 %1137
        %v1140 = vsel %vm770, %v1136, 0
        %v1143 = vsel %vm770, %v1138, 0
        %1145 = vmatpush.bf16.xpose.msra.mxu0 0
        %1146 = vmatpush.bf16.xpose.msra.mxu0 0
        %1147 = vmatpush.bf16.xpose.msra.mxu0 0
        %1148 = vmatpush.bf16.xpose.msra.mxu0 0
        %1149 = vmatpush.bf16.xpose.msra.mxu0 0
        %1150 = vmatpush.bf16.xpose.msra.mxu0 0
        %1151 = vmatpush.bf16.xpose.msra.mxu0 0
        %1152 = vmatpush.bf16.xpose.msra.mxu0 %v1143
        %1153 = vmatmul.bf16.gmra.mxu0 %v1140
        %v1154 = vpop.f32.mrf.mxu0
        %v1155 = vadd.f32 %v758, %v1154
        %v1156 = vpop.f32.mrf.mxu0
        %1157 = vdwg.mxu0
        %1158 = vrot.lane.b32.xlu0 %v911, 104
        %v1159 = vpop.permute.xlu0 %1158
        %1160 = vrot.lane.b32.xlu0 %v792, 72
        %v1161 = vpop.permute.xlu0 %1160
        %v1163 = vsel %vm770, %v1159, 0
        %v1166 = vsel %vm770, %v1161, 0
        %1168 = vmatpush.bf16.xpose.msra.mxu0 0
        %1169 = vmatpush.bf16.xpose.msra.mxu0 0
        %1170 = vmatpush.bf16.xpose.msra.mxu0 0
        %1171 = vmatpush.bf16.xpose.msra.mxu0 0
        %1172 = vmatpush.bf16.xpose.msra.mxu0 0
        %1173 = vmatpush.bf16.xpose.msra.mxu0 0
        %1174 = vmatpush.bf16.xpose.msra.mxu0 0
        %1175 = vmatpush.bf16.xpose.msra.mxu0 %v1166
        %1176 = vmatmul.bf16.gmra.mxu0 %v1163
        %v1177 = vpop.f32.mrf.mxu0
        %v1178 = vadd.f32 %v758, %v1177
        %v1179 = vpop.f32.mrf.mxu0
        %1180 = vdwg.mxu0
        %v1181 = vsel %vm770, %v1155, -inf
        %1182 = vmax.xlane.f32.xlu0 %v1181
        %v1183 = vpop.xlane.xlu0 %1182
        %v1184 = vsel %vm770, %v1178, -inf
        %1185 = vmax.xlane.f32.xlu0 %v1184
        %v1186 = vpop.xlane.xlu0 %1185
        %v1187 = vsub.f32 %v1155, %v1183
        %v1188 = vsub.f32 %v1178, %v1186
        %v1189 = vmul.f32 %v1187, 1.442695
        %v1190 = vpow.pop %v1189
        %v1191 = vmul.f32 %v1188, 1.442695
        %v1192 = vpow.pop %v1191
        %v1193 = vsel %vm770, %v1190, 0.0
        %1194 = vadd.xlane.f32.xlu0 %v1193
        %v1195 = vpop.xlane.xlu0 %1194
        %v1196 = vsel %vm770, %v1192, 0.0
        %1197 = vadd.xlane.f32.xlu0 %v1196
        %v1198 = vpop.xlane.xlu0 %1197
        %v1199 = vrcp.pop %v1195
        %v1200 = vrcp.pop %v1198
        %v1201 = vmul.f32 %v1190, %v1199
        %v1202 = vmul.f32 %v1192, %v1200
        %v1203 = vpack.c.bf16 %v1201, %v1201
        %v1204 = vpack.c.bf16 %v1202, %v1202
        %1205 = vrot.lane.b32.xlu0 %v767, 40
        %v1206 = vpop.permute.xlu0 %1205
        %v1208 = vsel %vm770, %v1203, 0
        %v1211 = vsel %vm843, %v1206, 0
        %1213 = vmatpush.bf16.msra.mxu0 0
        %1214 = vmatpush.bf16.msra.mxu0 0
        %1215 = vmatpush.bf16.msra.mxu0 0
        %1216 = vmatpush.bf16.msra.mxu0 0
        %1217 = vmatpush.bf16.msra.mxu0 0
        %1218 = vmatpush.bf16.msra.mxu0 0
        %1219 = vmatpush.bf16.msra.mxu0 0
        %1220 = vmatpush.bf16.msra.mxu0 %v1211
        %1221 = vmatmul.bf16.gmra.mxu0 %v1208
        %v1222 = vpop.f32.mrf.mxu0
        %v1223 = vadd.f32 0.0, %v1222
        %v1224 = vpop.f32.mrf.mxu0
        %1225 = vdwg.mxu0
        %1226 = vrot.lane.b32.xlu0 %v792, 40
        %v1227 = vpop.permute.xlu0 %1226
        %v1229 = vsel %vm770, %v1204, 0
        %v1232 = vsel %vm843, %v1227, 0
        %1234 = vmatpush.bf16.msra.mxu0 0
        %1235 = vmatpush.bf16.msra.mxu0 0
        %1236 = vmatpush.bf16.msra.mxu0 0
        %1237 = vmatpush.bf16.msra.mxu0 0
        %1238 = vmatpush.bf16.msra.mxu0 0
        %1239 = vmatpush.bf16.msra.mxu0 0
        %1240 = vmatpush.bf16.msra.mxu0 0
        %1241 = vmatpush.bf16.msra.mxu0 %v1232
        %1242 = vmatmul.bf16.gmra.mxu0 %v1229
        %v1243 = vpop.f32.mrf.mxu0
        %v1244 = vadd.f32 0.0, %v1243
        %v1245 = vpop.f32.mrf.mxu0
        %1246 = vdwg.mxu0
        %1249 = vrot.lane.b32.xlu0 %v1223, 24
        %v1250 = vpop.permute.xlu0 %1249
        %1251 = vrot.lane.b32.xlu0 %v1244, 24
        %v1252 = vpop.permute.xlu0 %1251
        %vm1255 = vcmask 261312
        %1256 = vst.msk [vmem:[#allocation3] sm:$0xff] %vm1255, %v1250
        %1257 = vst.msk [vmem:[#allocation3 + $0x8] sm:$0xff] %vm1255, %v1252
        %v1258 = vld [vmem:[#allocation3] sm:$0xff]
        %v1259 = vld [vmem:[#allocation3 + $0x8] sm:$0xff]
        %v1260 = vpack.c.bf16 %v1259, %v1258
        %v1261 = vld [vmem:[%s612] sm:$0xf]
        %v1262 = vld [vmem:[%s612 + $0x4] sm:$0xf]
        %v1263 = vld [vmem:[%s612 + $0x8] sm:$0xf]
        %v1264 = vld [vmem:[%s612 + $0xc] sm:$0xf]
        %v1265 = vld [vmem:[%s615] sm:$0x1]
        %v1267 = vperm.slane %v1265, 0
        %v1273 = vunpack.c.l.b16 %v1261
        %v1274 = vunpack.c.l.b16 %v1262
        %v1275 = vunpack.c.l.b16 %v1263
        %v1276 = vunpack.c.l.b16 %v1264
        %v1277 = vpack.c.b16 %v1274, %v1273
        %v1278 = vpack.c.b16 %v1276, %v1275
        %v1282 = vsel %vm653, %v1260, 0
        %1284 = vmatpush.bf16.msra.mxu0 0
        %1285 = vmatpush.bf16.msra.mxu0 0
        %1286 = vmatpush.bf16.msra.mxu0 0
        %1287 = vmatpush.bf16.msra.mxu0 0
        %1288 = vmatpush.bf16.msra.mxu0 0
        %1289 = vmatpush.bf16.msra.mxu0 0
        %1290 = vmatpush.bf16.msra.mxu0 %v1278
        %1291 = vmatpush.bf16.msra.mxu0 %v1277
        %1292 = vmatmul.bf16.gmra.mxu0 %v1282
        %v1293 = vpop.f32.mrf.mxu0
        %v1294 = vadd.f32 %v1267, %v1293
        %v1295 = vpop.f32.mrf.mxu0
        %v1296 = vadd.f32 %v1267, %v1295
        %1297 = vdwg.mxu0
        %v1298 = vadd.f32 %v649, %v1294
        %v1299 = vadd.f32 %v650, %v1296
        %v1300 = vld [vmem:[%s618] sm:$0x1]
        %v1301 = vld [vmem:[%s621] sm:$0x1]
        %v1302 = vsel %vm653, %v1298, 0.0
        %1303 = vadd.xlane.f32.xlu0 %v1302
        %v1304 = vpop.xlane.xlu0 %1303
        %v1305 = vsel %vm653, %v1299, 0.0
        %1306 = vadd.xlane.f32.xlu0 %v1305
        %v1307 = vpop.xlane.xlu0 %1306
        %v1308 = vmul.f32 %v1304, %v666
        %v1309 = vmul.f32 %v1307, %v666
        %v1310 = vsub.f32 %v1298, %v1308
        %v1311 = vsub.f32 %v1299, %v1309
        %v1312 = vmul.f32 %v1310, %v1310
        %v1313 = vmul.f32 %v1311, %v1311
        %v1314 = vsel %vm653, %v1312, 0.0
        %1315 = vadd.xlane.f32.xlu0 %v1314
        %v1316 = vpop.xlane.xlu0 %1315
        %v1317 = vsel %vm653, %v1313, 0.0
        %1318 = vadd.xlane.f32.xlu0 %v1317
        %v1319 = vpop.xlane.xlu0 %1318
        %v1320 = vmul.f32 %v1316, %v666
        %v1321 = vmul.f32 %v1319, %v666
        %v1322 = vadd.f32 %v1320, 1e-05
        %v1323 = vadd.f32 %v1321, 1e-05
        %v1324 = vrsqrt.pop %v1322
        %v1325 = vmul.f32 %v1324, %v1322
        %v1326 = vmul.f32 %v1325, %v1324
        %v1327 = vmul.f32 0.5, %v1326
        %v1328 = vsub.f32 1.5, %v1327
        %v1329 = vmul.f32 %v1324, %v1328
        %vm1330 = vweird.f32 %v1322
        %vm1331 = vweird.f32 %v1324
        %vm1332 = vmor %vm1330, %vm1331
        %v1333 = vsel %vm1332, %v1324, %v1329
        %v1334 = vrsqrt.pop %v1323
        %v1335 = vmul.f32 %v1334, %v1323
        %v1336 = vmul.f32 %v1335, %v1334
        %v1337 = vmul.f32 0.5, %v1336
        %v1338 = vsub.f32 1.5, %v1337
        %v1339 = vmul.f32 %v1334, %v1338
        %vm1340 = vweird.f32 %v1323
        %vm1341 = vweird.f32 %v1334
        %vm1342 = vmor %vm1340, %vm1341
        %v1343 = vsel %vm1342, %v1334, %v1339
        %v1344 = vmul.f32 %v1310, %v1333
        %v1345 = vmul.f32 %v1311, %v1343
        %v1347 = vperm.slane %v1300, 0
        %v1349 = vmul.f32 %v1344, %v1347
        %v1350 = vmul.f32 %v1345, %v1347
        %v1352 = vperm.slane %v1301, 0
        %v1354 = vadd.f32 %v1349, %v1352
        %v1355 = vadd.f32 %v1350, %v1352
        %v1356 = vpack.c.bf16 %v1355, %v1354
        %v1357 = vld [vmem:[%s626] sm:$0xf]
        %v1358 = vld [vmem:[%s626 + $0x4] sm:$0xf]
        %v1359 = vld [vmem:[%s626 + $0x8] sm:$0xf]
        %v1360 = vld [vmem:[%s626 + $0xc] sm:$0xf]
        %v1361 = vld [vmem:[%s629] sm:$0x1]
        %v1363 = vperm.slane %v1361, 0
        %v1369 = vunpack.c.l.b16 %v1357
        %v1370 = vunpack.c.l.b16 %v1358
        %v1371 = vunpack.c.l.b16 %v1359
        %v1372 = vunpack.c.l.b16 %v1360
        %v1373 = vpack.c.b16 %v1370, %v1369
        %v1374 = vpack.c.b16 %v1372, %v1371
        %v1378 = vsel %vm653, %v1356, 0
        %1380 = vmatpush.bf16.msra.mxu0 0
        %1381 = vmatpush.bf16.msra.mxu0 0
        %1382 = vmatpush.bf16.msra.mxu0 0
        %1383 = vmatpush.bf16.msra.mxu0 0
        %1384 = vmatpush.bf16.msra.mxu0 0
        %1385 = vmatpush.bf16.msra.mxu0 0
        %1386 = vmatpush.bf16.msra.mxu0 %v1374
        %1387 = vmatpush.bf16.msra.mxu0 %v1373
        %1388 = vmatmul.bf16.gmra.mxu0 %v1378
        %v1389 = vpop.f32.mrf.mxu0
        %v1390 = vadd.f32 %v1363, %v1389
        %v1391 = vpop.f32.mrf.mxu0
        %v1392 = vadd.f32 %v1363, %v1391
        %1393 = vdwg.mxu0
        %v1394 = vmul.f32 %v1390, 1.702
        %v1395 = vmul.f32 %v1392, 1.702
        %v1396 = vxor.u32 %v1394, 2147483648
        %v1397 = vxor.u32 %v1395, 2147483648
        %v1398 = vmul.f32 %v1396, 1.442695
        %v1399 = vpow.pop %v1398
        %v1400 = vmul.f32 %v1397, 1.442695
        %v1401 = vpow.pop %v1400
        %v1402 = vadd.f32 %v1399, 1.0
        %v1403 = vadd.f32 %v1401, 1.0
        %v1404 = vrcp.pop %v1402
        %v1405 = vmul.f32 %v1402, %v1404
        %v1406 = vsub.f32 1.0, %v1405
        %v1407 = vmul.f32 %v1404, %v1406
        %v1408 = vadd.f32 %v1404, %v1407
        %vm1409 = vweird.f32 %v1402
        %vm1410 = vweird.f32 %v1404
        %vm1411 = vmor %vm1409, %vm1410
        %v1412 = vsel %vm1411, %v1404, %v1408
        %v1413 = vand.u32 2147483647, %v1402
        %vm1414 = vcmp.eq.f32.partialorder %v1413, 8.507059e+37
        %v1415 = vand.u32 %v1402, 2147483648
        %v1416 = vor.u32 1.1754944e-38, %v1415
        %v1417 = vsel %vm1414, %v1416, %v1412
        %v1418 = vmul.f32 1.0, %v1417
        %v1419 = vrcp.pop %v1403
        %v1420 = vmul.f32 %v1403, %v1419
        %v1421 = vsub.f32 1.0, %v1420
        %v1422 = vmul.f32 %v1419, %v1421
        %v1423 = vadd.f32 %v1419, %v1422
        %vm1424 = vweird.f32 %v1403
        %vm1425 = vweird.f32 %v1419
        %vm1426 = vmor %vm1424, %vm1425
        %v1427 = vsel %vm1426, %v1419, %v1423
        %v1428 = vand.u32 2147483647, %v1403
        %vm1429 = vcmp.eq.f32.partialorder %v1428, 8.507059e+37
        %v1430 = vand.u32 %v1403, 2147483648
        %v1431 = vor.u32 1.1754944e-38, %v1430
        %v1432 = vsel %vm1429, %v1431, %v1427
        %v1433 = vmul.f32 1.0, %v1432
        %v1434 = vmul.f32 %v1390, %v1418
        %v1435 = vmul.f32 %v1392, %v1433
        %v1436 = vpack.c.bf16 %v1435, %v1434
        %v1437 = vld [vmem:[%s634] sm:$0xf]
        %v1438 = vld [vmem:[%s634 + $0x4] sm:$0xf]
        %v1439 = vld [vmem:[%s634 + $0x8] sm:$0xf]
        %v1440 = vld [vmem:[%s634 + $0xc] sm:$0xf]
        %v1441 = vld [vmem:[%s634 + $0x10] sm:$0xf]
        %v1442 = vld [vmem:[%s634 + $0x14] sm:$0xf]
        %v1443 = vld [vmem:[%s634 + $0x18] sm:$0xf]
        %v1444 = vld [vmem:[%s634 + $0x1c] sm:$0xf]
        %v1445 = vld [vmem:[%s634 + $0x20] sm:$0xf]
        %v1446 = vld [vmem:[%s634 + $0x24] sm:$0xf]
        %v1447 = vld [vmem:[%s634 + $0x28] sm:$0xf]
        %v1448 = vld [vmem:[%s634 + $0x2c] sm:$0xf]
        %v1449 = vld [vmem:[%s634 + $0x30] sm:$0xf]
        %v1450 = vld [vmem:[%s634 + $0x34] sm:$0xf]
        %v1451 = vld [vmem:[%s634 + $0x38] sm:$0xf]
        %v1452 = vld [vmem:[%s634 + $0x3c] sm:$0xf]
        %v1453 = vld [vmem:[%s637] sm:$0x1]
        %v1455 = vperm.slane %v1453, 0
        %v1473 = vunpack.c.l.b16 %v1437
        %v1474 = vunpack.c.l.b16 %v1438
        %v1475 = vunpack.c.l.b16 %v1439
        %v1476 = vunpack.c.l.b16 %v1440
        %v1477 = vunpack.c.l.b16 %v1441
        %v1478 = vunpack.c.l.b16 %v1442
        %v1479 = vunpack.c.l.b16 %v1443
        %v1480 = vunpack.c.l.b16 %v1444
        %v1481 = vunpack.c.l.b16 %v1445
        %v1482 = vunpack.c.l.b16 %v1446
        %v1483 = vunpack.c.l.b16 %v1447
        %v1484 = vunpack.c.l.b16 %v1448
        %v1485 = vunpack.c.l.b16 %v1449
        %v1486 = vunpack.c.l.b16 %v1450
        %v1487 = vunpack.c.l.b16 %v1451
        %v1488 = vunpack.c.l.b16 %v1452
        %v1489 = vpack.c.b16 %v1474, %v1473
        %v1490 = vpack.c.b16 %v1476, %v1475
        %v1491 = vpack.c.b16 %v1478, %v1477
        %v1492 = vpack.c.b16 %v1480, %v1479
        %v1493 = vpack.c.b16 %v1482, %v1481
        %v1494 = vpack.c.b16 %v1484, %v1483
        %v1495 = vpack.c.b16 %v1486, %v1485
        %v1496 = vpack.c.b16 %v1488, %v1487
        %1505 = vmatpush.bf16.msra.mxu0 %v1496
        %1506 = vmatpush.bf16.msra.mxu0 %v1495
        %1507 = vmatpush.bf16.msra.mxu0 %v1494
        %1508 = vmatpush.bf16.msra.mxu0 %v1493
        %1509 = vmatpush.bf16.msra.mxu0 %v1492
        %1510 = vmatpush.bf16.msra.mxu0 %v1491
        %1511 = vmatpush.bf16.msra.mxu0 %v1490
        %1512 = vmatpush.bf16.msra.mxu0 %v1489
        %1513 = vmatmul.bf16.gmra.mxu0 %v1436
        %v1514 = vpop.f32.mrf.mxu0
        %v1515 = vadd.f32 %v1455, %v1514
        %v1516 = vpop.f32.mrf.mxu0
        %v1517 = vadd.f32 %v1455, %v1516
        %1518 = vdwg.mxu0
        %v1519 = vadd.f32 %v1298, %v1515
        %v1520 = vadd.f32 %v1299, %v1517
        %1521 = vst.msk [vmem:[#allocation2] sm:$0xff] %vm653, %v1519
        %1522 = vst.msk [vmem:[#allocation2 + $0x8] sm:$0xff] %vm653, %v1520
        %p1523 = scmp.eq.s32.totalorder %s30, 1
        // Predicated region
        $region77: #{tpu_custom_call.1} parent=71 // pred_check
          %p1524 = pneg %p1523
        $region78: #{tpu_custom_call.1} parent=71 // pred_check_branch
          %1526 = sbr.rel (%p1524) target = $region80
        $region79: #{tpu_custom_call.1} parent=71 // pred_region
          %1527 = vst.msk [vmem:[#allocation4] sm:$0xff] %vm653, %v1519
          %1528 = vst.msk [vmem:[#allocation4 + $0x8] sm:$0xff] %vm653, %v1520
        $region80: #{tpu_custom_call.1} parent=71 // pred_fallthru
          _
        // Predicated region
        $region81: #{tpu_custom_call.1} parent=71 // pred_check
          %p1529 = pneg %p393
        $region82: #{tpu_custom_call.1} parent=71 // pred_check_branch
          %1531 = sbr.rel (%p1529) target = $region84
        $region83: #{tpu_custom_call.1} parent=71 // pred_region
          %s1532 = smul.u32 2, %s29
          %1534 = vsyncadd [#allocation5], 0
          %s1535 = smul.addr %s1532, 8
          %s1536 = scalar_lea.hbm %s13, %s1535
          %s1537 = sshll.u32 [#allocation4], 4
          %s1538 = int_to_ptr.vmem [resolvable:$true] %s1537
          %s1539 = sshll.u32 %s1536, 4
          %s1540 = int_to_ptr.hbm [resolvable:$true] %s1539
          %1545 = dma.vmem_to_hbm [thread:$0]  %s1538, 256, %s1540, [#allocation5], 128, 128, 8
        $region84: #{tpu_custom_call.1} parent=71 // pred_fallthru
          _
        // Predicated region
        $region85: #{tpu_custom_call.1} parent=71 // pred_check
          %p1546 = pneg %p393
        $region86: #{tpu_custom_call.1} parent=71 // pred_check_branch
          %1548 = sbr.rel (%p1546) target = $region88
        $region87: #{tpu_custom_call.1} parent=71 // pred_region
          %1550 = dma.done [#allocation5], 256
        $region88: #{tpu_custom_call.1} parent=71 // pred_fallthru
          _
      $region72: #{tpu_custom_call.1} parent=5 // pred_fallthru
        _
      %p1551 = scmp.le.s32.totalorder 2, %s20
      // Predicated region
      $region89: #{tpu_custom_call.1} parent=5 // pred_check
        %p1552 = pneg %p1551
      $region90: #{tpu_custom_call.1} parent=5 // pred_check_branch
        %1554 = sbr.rel (%p1552) target = $region92
      $region91: #{tpu_custom_call.1} parent=5 // pred_region
        %s1555 = ssub.s32 %s20, 2
      $region92: #{tpu_custom_call.1} parent=5 // pred_fallthru
        _
    $region6: #{tpu_custom_call.1} parent=1 // loop_footer
      %s24 = sadd.s32 1, %s20
    $region7: #{tpu_custom_call.1} parent=1 // loop_footer_branch
      %19 = sbr.rel target = $region3
    $region8: #{tpu_custom_call.1} parent=1 // loop_exit
      _
    %1556 = vsyncpa [#allocation5], 1
    %s1557 = scalar_lea.sflag [#allocation5], 1
    %1558 = vsyncpa %s1557, 1

</llo_original>
